<compile_context>
chip_gen: v7x
topology: tpu7x:2x2x1
jax: 0.10.0
libtpu: 0.0.40
codegen_flags: <defaults>
</compile_context>

<pallas_src>
import math

import numpy as np
import jax
import jax.numpy as jnp
from jax.experimental import pallas as pl
from jax.experimental.pallas import tpu as pltpu

NUM_FREQ_CHANNELS = 256  # diffusers Timesteps(num_channels=256) inside the embedder


def _silu(x):
    return x * jax.nn.sigmoid(x)


def _ada_ln_single_kernel(t_ref, f_ref, w1_ref, b1_ref, w2_ref, b2_ref,
                          w3_ref, b3_ref, out_ref, emb_ref, s_ref):
    """Grid: (6D // TN,).  Steady state: one (B,D)x(D,TN) matmul; prologue only at j==0.

    t_ref  : (B, 1)    f32 timesteps                  (resident)
    f_ref  : (1, 128)  f32 sinusoidal frequencies     (resident, host-precomputed)
    w1/b1  : (256, D) f32, (1, D) f32                 (resident)
    w2/b2  : (D, D)  bf16, (1, D) f32                 (resident)
    w3/b3  : (D, TN) bf16, (1, TN) f32                (streamed column tile j)
    out_ref: (B, TN)   f32   tile j of the (B, 6D) output
    emb_ref: (B, D)    f32   embedded_timestep (constant block, written at j==0)
    s_ref  : (B, D)   bf16   scratch holding SiLU(emb), reused by every tile
    """

    @pl.when(pl.program_id(0) == 0)
    def _prologue():
        # Sinusoidal projection: flip_sin_to_cos=True -> [cos | sin], shape (B, 256).
        arg = t_ref[...] * f_ref[...]
        t_proj = jnp.concatenate([jnp.cos(arg), jnp.sin(arg)], axis=-1)
        # TimestepEmbedding: Linear(256, D) -> SiLU -> Linear(D, D).
        h = jnp.dot(t_proj, w1_ref[...],
                    preferred_element_type=jnp.float32) + b1_ref[...]
        h = _silu(h)
        emb = jnp.dot(h.astype(w2_ref.dtype), w2_ref[...],
                      preferred_element_type=jnp.float32) + b2_ref[...]
        emb_ref[...] = emb
        s_ref[...] = _silu(emb).astype(s_ref.dtype)

    # AdaLayerNormSingle.linear, output-column tile j: (B, D) @ (D, TN) + (1, TN).
    out_ref[...] = (
        jnp.dot(s_ref[...], w3_ref[...], preferred_element_type=jnp.float32)
        + b3_ref[...]
    )


def _pick_tile_n(n6):
    """Largest multiple of 128 that divides 6*D and is <= 1024; else the full width."""
    best = None
    tn = 128
    while tn <= min(n6, 1024):
        if n6 % tn == 0:
            best = tn
        tn += 128
    return best if best is not None else n6


def ada_layer_norm_single(timestep, params, *, tile_n=None):
    """timestep: (B,) float32.  Returns (out (B, 6D) f32, embedded_timestep (B, D) f32)."""
    B = timestep.shape[0]
    D = params["w2"].shape[1]
    N6 = 6 * D
    half = NUM_FREQ_CHANNELS // 2

    t2d = timestep.astype(jnp.float32).reshape(B, 1)
    # Host-precomputed frequency row (max_period=10000, downscale_freq_shift=0).
    freqs = jnp.asarray(
        np.exp((-math.log(10000.0) / half) * np.arange(half, dtype=np.float32))
    ).reshape(1, half)

    tn = tile_n if tile_n is not None else _pick_tile_n(N6)
    assert N6 % tn == 0
    grid = (N6 // tn,)

    w1, b1 = params["w1"], params["b1"]
    w2, b2 = params["w2"], params["b2"]
    w3, b3 = params["w3"], params["b3"]

    def const(shape):
        return pl.BlockSpec(shape, lambda j: (0, 0))

    grid_spec = pltpu.PrefetchScalarGridSpec(
        num_scalar_prefetch=0,
        grid=grid,
        in_specs=[
            const((B, 1)),                               # timesteps
            const((1, half)),                            # frequency row
            const((NUM_FREQ_CHANNELS, D)),               # w1 (resident)
            const((1, D)),                               # b1
            const((D, D)),                               # w2 (resident, bf16)
            const((1, D)),                               # b2
            pl.BlockSpec((D, tn), lambda j: (0, j)),     # w3 column tile (streamed)
            pl.BlockSpec((1, tn), lambda j: (0, j)),     # b3 tile
        ],
        out_specs=(
            pl.BlockSpec((B, tn), lambda j: (0, j)),     # out tile
            pl.BlockSpec((B, D), lambda j: (0, 0)),      # emb (written once, resident)
        ),
        scratch_shapes=[pltpu.VMEM((B, D), jnp.bfloat16)],   # SiLU(emb)
    )

    inputs = (t2d, freqs, w1, b1, w2, b2, w3, b3)
    bytes_accessed = int(
        sum(a.size * a.dtype.itemsize for a in inputs) + B * N6 * 4 + B * D * 4
    )
    cost = pl.CostEstimate(
        flops=2 * B * (NUM_FREQ_CHANNELS * D + D * D + D * N6),
        transcendentals=B * (NUM_FREQ_CHANNELS + 2 * D),
        bytes_accessed=bytes_accessed,
    )

    out, emb = pl.pallas_call(
        _ada_ln_single_kernel,
        out_shape=(
            jax.ShapeDtypeStruct((B, N6), jnp.float32),
            jax.ShapeDtypeStruct((B, D), jnp.float32),
        ),
        grid_spec=grid_spec,
        compiler_params=pltpu.CompilerParams(
            dimension_semantics=("arbitrary",)),
        cost_estimate=cost,
    )(*inputs)
    return out, emb


def init_params(key, embedding_dim):
    """Deterministic synthetic parameters.

    Weights are stored transposed vs. PyTorch, i.e. (in_features, out_features), so the
    kernel computes x @ W + b.  w2/w3 are kept in bfloat16 (the op is HBM-bandwidth
    bound on weight bytes; the MXU takes bf16 natively, accumulation stays f32).
    """
    D = embedding_dim
    ks = jax.random.split(key, 6)

    def lin(kw, kb, fan_in, fan_out, w_dtype=jnp.float32):
        bound = 1.0 / math.sqrt(fan_in)
        w = jax.random.uniform(kw, (fan_in, fan_out), jnp.float32, -bound, bound)
        b = jax.random.uniform(kb, (1, fan_out), jnp.float32, -bound, bound)
        return w.astype(w_dtype), b

    w1, b1 = lin(ks[0], ks[1], NUM_FREQ_CHANNELS, D)            # TimestepEmbedding.linear_1
    w2, b2 = lin(ks[2], ks[3], D, D, jnp.bfloat16)              # TimestepEmbedding.linear_2
    w3, b3 = lin(ks[4], ks[5], D, 6 * D, jnp.bfloat16)          # AdaLayerNormSingle.linear
    # TODO(synk): use_additional_conditions=True branch (resolution / aspect_ratio
    # embedders) not implemented; module default is False.
    return dict(w1=w1, b1=b1, w2=w2, b2=b2, w3=w3, b3=b3)


def _reference(timestep, params):
    """Pure-JAX f32 reference mirroring the PyTorch forward (weights upcast from storage)."""
    half = NUM_FREQ_CHANNELS // 2
    freqs = jnp.exp((-math.log(10000.0) / half) * jnp.arange(half, dtype=jnp.float32))
    arg = timestep.astype(jnp.float32)[:, None] * freqs[None, :]
    t_proj = jnp.concatenate([jnp.cos(arg), jnp.sin(arg)], axis=-1)  # flip_sin_to_cos
    w1 = params["w1"].astype(jnp.float32)
    w2 = params["w2"].astype(jnp.float32)
    w3 = params["w3"].astype(jnp.float32)
    h = jax.nn.silu(t_proj @ w1 + params["b1"])
    emb = h @ w2 + params["b2"]
    out = jax.nn.silu(emb) @ w3 + params["b3"]
    return out, emb


if __name__ == "__main__":
    batch = 4
    embedding_dim = 384  # divisible by 3 (size_emb_dim = 128) and lane-aligned

    key = jax.random.PRNGKey(0)
    k_param, k_t = jax.random.split(key)
    params = init_params(k_param, embedding_dim)
    timestep = jax.random.uniform(k_t, (batch,), jnp.float32, 0.0, 1000.0)

    out, emb = jax.jit(ada_layer_norm_single)(timestep, params)
    jax.block_until_ready((out, emb))

    ref_out, ref_emb = _reference(timestep, params)
    assert out.shape == (batch, 6 * embedding_dim) and emb.shape == (batch, embedding_dim)
    # Loosened tolerance: w2/w3 are streamed as bf16 (f32 accumulation).
    assert jnp.allclose(out, ref_out, atol=1e-2, rtol=1e-2)
    assert jnp.allclose(emb, ref_emb, atol=1e-2, rtol=1e-2)

    print("KERNEL_OK")
</pallas_src>

<mosaic_0001>
module attributes {stable_mosaic.version = 11 : i64} {
  func.func @_ada_ln_single_kernel(%arg0: i32, %arg1: memref<4x1xf32, #tpu.memory_space<vmem>>, %arg2: memref<1x128xf32, #tpu.memory_space<vmem>>, %arg3: memref<256x384xf32, #tpu.memory_space<vmem>>, %arg4: memref<1x384xf32, #tpu.memory_space<vmem>>, %arg5: memref<384x384xbf16, #tpu.memory_space<vmem>>, %arg6: memref<1x384xf32, #tpu.memory_space<vmem>>, %arg7: memref<384x768xbf16, #tpu.memory_space<vmem>>, %arg8: memref<1x768xf32, #tpu.memory_space<vmem>>, %arg9: memref<4x768xf32, #tpu.memory_space<vmem>>, %arg10: memref<4x384xf32, #tpu.memory_space<vmem>>, %arg11: memref<4x384xbf16, #tpu.memory_space<vmem>>) attributes {dimension_semantics = [#tpu.dimension_semantics<arbitrary>], iteration_bounds = array<i64: 3>, scalar_prefetch = 0 : i64, scratch_operands = 1 : i64, tpu.core_type = #tpu.core_type<tc>, window_params = [{pipeline_mode = #tpu.pipeline_mode<synchronous>, transform_indices = @transform_0, window_bounds = array<i64: 4, 1>}, {pipeline_mode = #tpu.pipeline_mode<synchronous>, transform_indices = @transform_1, window_bounds = array<i64: 1, 128>}, {pipeline_mode = #tpu.pipeline_mode<synchronous>, transform_indices = @transform_2, window_bounds = array<i64: 256, 384>}, {pipeline_mode = #tpu.pipeline_mode<synchronous>, transform_indices = @transform_3, window_bounds = array<i64: 1, 384>}, {pipeline_mode = #tpu.pipeline_mode<synchronous>, transform_indices = @transform_4, window_bounds = array<i64: 384, 384>}, {pipeline_mode = #tpu.pipeline_mode<synchronous>, transform_indices = @transform_5, window_bounds = array<i64: 1, 384>}, {transform_indices = @transform_6, window_bounds = array<i64: 384, 768>}, {transform_indices = @transform_7, window_bounds = array<i64: 1, 768>}, {transform_indices = @transform_8, window_bounds = array<i64: 4, 768>}, {pipeline_mode = #tpu.pipeline_mode<synchronous>, transform_indices = @transform_9, window_bounds = array<i64: 4, 384>}]} {
    %c0_i32 = arith.constant 0 : i32
    %0 = arith.cmpi eq, %arg0, %c0_i32 : i32
    %1 = arith.extui %0 : i1 to i32
    %c0_i32_0 = arith.constant 0 : i32
    %2 = arith.cmpi ne, %1, %c0_i32_0 : i32
    scf.if %2 {
      %c0_8 = arith.constant 0 : index
      %c0_9 = arith.constant 0 : index
      %10 = vector.load %arg1[%c0_8, %c0_9] : memref<4x1xf32, #tpu.memory_space<vmem>>, vector<4x1xf32>
      %c0_10 = arith.constant 0 : index
      %c0_11 = arith.constant 0 : index
      %11 = vector.load %arg2[%c0_10, %c0_11] : memref<1x128xf32, #tpu.memory_space<vmem>>, vector<1x128xf32>
      %12 = vector.broadcast %10 : vector<4x1xf32> to vector<4x128xf32>
      %13 = vector.broadcast %11 : vector<1x128xf32> to vector<4x128xf32>
      %14 = arith.mulf %12, %13 : vector<4x128xf32>
      %15 = math.cos %14 : vector<4x128xf32>
      %16 = math.sin %14 : vector<4x128xf32>
      %17 = tpu.concatenate %15, %16 in 1 : vector<4x128xf32>, vector<4x128xf32> -> vector<4x256xf32>
      %c0_12 = arith.constant 0 : index
      %c0_13 = arith.constant 0 : index
      %18 = vector.load %arg3[%c0_12, %c0_13] : memref<256x384xf32, #tpu.memory_space<vmem>>, vector<256x384xf32>
      %cst_14 = arith.constant dense<0.000000e+00> : vector<4x384xf32>
      %19 = tpu.matmul %17, %18, %cst_14 {dimension_numbers = #tpu.dot_dimension_numbers<[1], [0], [0], [1], [0, 0, 1, 1], [], []>} : vector<4x256xf32>, vector<256x384xf32>, vector<4x384xf32> -> vector<4x384xf32>
      %c0_15 = arith.constant 0 : index
      %c0_16 = arith.constant 0 : index
      %20 = vector.load %arg4[%c0_15, %c0_16] : memref<1x384xf32, #tpu.memory_space<vmem>>, vector<1x384xf32>
      %21 = vector.broadcast %20 : vector<1x384xf32> to vector<4x384xf32>
      %22 = arith.addf %19, %21 : vector<4x384xf32>
      %23 = arith.negf %22 : vector<4x384xf32>
      %24 = math.exp %23 : vector<4x384xf32>
      %cst_17 = arith.constant 1.000000e+00 : f32
      %25 = vector.broadcast %cst_17 : f32 to vector<4x384xf32>
      %26 = arith.addf %25, %24 : vector<4x384xf32>
      %27 = arith.divf %25, %26 : vector<4x384xf32>
      %28 = arith.mulf %22, %27 : vector<4x384xf32>
      %29 = arith.truncf %28 : vector<4x384xf32> to vector<4x384xbf16>
      %c0_18 = arith.constant 0 : index
      %c0_19 = arith.constant 0 : index
      %30 = vector.load %arg5[%c0_18, %c0_19] : memref<384x384xbf16, #tpu.memory_space<vmem>>, vector<384x384xbf16>
      %cst_20 = arith.constant dense<0.000000e+00> : vector<4x384xf32>
      %31 = tpu.matmul %29, %30, %cst_20 {dimension_numbers = #tpu.dot_dimension_numbers<[1], [0], [0], [1], [0, 0, 1, 1], [], []>} : vector<4x384xbf16>, vector<384x384xbf16>, vector<4x384xf32> -> vector<4x384xf32>
      %c0_21 = arith.constant 0 : index
      %c0_22 = arith.constant 0 : index
      %32 = vector.load %arg6[%c0_21, %c0_22] : memref<1x384xf32, #tpu.memory_space<vmem>>, vector<1x384xf32>
      %33 = vector.broadcast %32 : vector<1x384xf32> to vector<4x384xf32>
      %34 = arith.addf %31, %33 : vector<4x384xf32>
      %c0_23 = arith.constant 0 : index
      %c0_24 = arith.constant 0 : index
      %35 = vector.load %arg10[%c0_23, %c0_24] : memref<4x384xf32, #tpu.memory_space<vmem>>, vector<4x384xf32>
      tpu.vector_store %arg10[%c0_23, %c0_24], %34 {strides = array<i32>} : memref<4x384xf32, #tpu.memory_space<vmem>>, vector<4x384xf32>,
      %36 = arith.negf %34 : vector<4x384xf32>
      %37 = math.exp %36 : vector<4x384xf32>
      %cst_25 = arith.constant 1.000000e+00 : f32
      %38 = vector.broadcast %cst_25 : f32 to vector<4x384xf32>
      %39 = arith.addf %38, %37 : vector<4x384xf32>
      %40 = arith.divf %38, %39 : vector<4x384xf32>
      %41 = arith.mulf %34, %40 : vector<4x384xf32>
      %42 = arith.truncf %41 : vector<4x384xf32> to vector<4x384xbf16>
      %c0_26 = arith.constant 0 : index
      %c0_27 = arith.constant 0 : index
      %43 = vector.load %arg11[%c0_26, %c0_27] : memref<4x384xbf16, #tpu.memory_space<vmem>>, vector<4x384xbf16>
      tpu.vector_store %arg11[%c0_26, %c0_27], %42 {strides = array<i32>} : memref<4x384xbf16, #tpu.memory_space<vmem>>, vector<4x384xbf16>,
    } else {
    }
    %c0 = arith.constant 0 : index
    %c0_1 = arith.constant 0 : index
    %3 = vector.load %arg11[%c0, %c0_1] : memref<4x384xbf16, #tpu.memory_space<vmem>>, vector<4x384xbf16>
    %c0_2 = arith.constant 0 : index
    %c0_3 = arith.constant 0 : index
    %4 = vector.load %arg7[%c0_2, %c0_3] : memref<384x768xbf16, #tpu.memory_space<vmem>>, vector<384x768xbf16>
    %cst = arith.constant dense<0.000000e+00> : vector<4x768xf32>
    %5 = tpu.matmul %3, %4, %cst {dimension_numbers = #tpu.dot_dimension_numbers<[1], [0], [0], [1], [0, 0, 1, 1], [], []>} : vector<4x384xbf16>, vector<384x768xbf16>, vector<4x768xf32> -> vector<4x768xf32>
    %c0_4 = arith.constant 0 : index
    %c0_5 = arith.constant 0 : index
    %6 = vector.load %arg8[%c0_4, %c0_5] : memref<1x768xf32, #tpu.memory_space<vmem>>, vector<1x768xf32>
    %7 = vector.broadcast %6 : vector<1x768xf32> to vector<4x768xf32>
    %8 = arith.addf %5, %7 : vector<4x768xf32>
    %c0_6 = arith.constant 0 : index
    %c0_7 = arith.constant 0 : index
    %9 = vector.load %arg9[%c0_6, %c0_7] : memref<4x768xf32, #tpu.memory_space<vmem>>, vector<4x768xf32>
    tpu.vector_store %arg9[%c0_6, %c0_7], %8 {strides = array<i32>} : memref<4x768xf32, #tpu.memory_space<vmem>>, vector<4x768xf32>,
    return
  }
  func.func @transform_0(%arg0: i32) -> (i32, i32) {
    %c0_i32 = arith.constant 0 : i32
    %c0_i32_0 = arith.constant 0 : i32
    %c0_i32_1 = arith.constant 0 : i32
    return %c0_i32, %c0_i32_0 : i32, i32
  }
  func.func @transform_1(%arg0: i32) -> (i32, i32) {
    %c0_i32 = arith.constant 0 : i32
    %c0_i32_0 = arith.constant 0 : i32
    %c0_i32_1 = arith.constant 0 : i32
    return %c0_i32, %c0_i32_0 : i32, i32
  }
  func.func @transform_2(%arg0: i32) -> (i32, i32) {
    %c0_i32 = arith.constant 0 : i32
    %c0_i32_0 = arith.constant 0 : i32
    %c0_i32_1 = arith.constant 0 : i32
    return %c0_i32, %c0_i32_0 : i32, i32
  }
  func.func @transform_3(%arg0: i32) -> (i32, i32) {
    %c0_i32 = arith.constant 0 : i32
    %c0_i32_0 = arith.constant 0 : i32
    %c0_i32_1 = arith.constant 0 : i32
    return %c0_i32, %c0_i32_0 : i32, i32
  }
  func.func @transform_4(%arg0: i32) -> (i32, i32) {
    %c0_i32 = arith.constant 0 : i32
    %c0_i32_0 = arith.constant 0 : i32
    %c0_i32_1 = arith.constant 0 : i32
    return %c0_i32, %c0_i32_0 : i32, i32
  }
  func.func @transform_5(%arg0: i32) -> (i32, i32) {
    %c0_i32 = arith.constant 0 : i32
    %c0_i32_0 = arith.constant 0 : i32
    %c0_i32_1 = arith.constant 0 : i32
    return %c0_i32, %c0_i32_0 : i32, i32
  }
  func.func @transform_6(%arg0: i32) -> (i32, i32) {
    %c0_i32 = arith.constant 0 : i32
    %c0_i32_0 = arith.constant 0 : i32
    return %c0_i32, %arg0 : i32, i32
  }
  func.func @transform_7(%arg0: i32) -> (i32, i32) {
    %c0_i32 = arith.constant 0 : i32
    %c0_i32_0 = arith.constant 0 : i32
    return %c0_i32, %arg0 : i32, i32
  }
  func.func @transform_8(%arg0: i32) -> (i32, i32) {
    %c0_i32 = arith.constant 0 : i32
    %c0_i32_0 = arith.constant 0 : i32
    return %c0_i32, %arg0 : i32, i32
  }
  func.func @transform_9(%arg0: i32) -> (i32, i32) {
    %c0_i32 = arith.constant 0 : i32
    %c0_i32_0 = arith.constant 0 : i32
    %c0_i32_1 = arith.constant 0 : i32
    return %c0_i32, %c0_i32_0 : i32, i32
  }
}

</mosaic_0001>

<llo_original>
// kernel: ada_layer_norm_single.1
$region0: #{ada_layer_norm_single.1}
  #allocation0 [shape = 'u32[]', space=smem, size = 0x4, offset = 0x4, fixed_abs, tag = 'smem constant byte address 0x4 - core index']
  #allocation1 [shape = 'u32[144,128]{1,0:T(1,128)}', space=vmem, size = 0x12000, scoped, tag = 'internal scratch']
  #allocation2 [shape = 'bf16[4,384]{1,0:T(4,128)(2,1)}', space=vmem, size = 0xc00, scoped, tag = 'scratch operand']
  %s0 = inlined_call_operand.vmem [shape: f32[4,1], index: 0, kind: input, shape index: {}]
  %s1 = inlined_call_operand.hbm [shape: f32[1,128], index: 1, kind: input, shape index: {}]
  %s2 = inlined_call_operand.hbm [shape: f32[256,384], index: 2, kind: input, shape index: {}]
  %s3 = inlined_call_operand.hbm [shape: f32[1,384], index: 3, kind: input, shape index: {}]
  %s4 = inlined_call_operand.hbm [shape: bf16[384,384], index: 4, kind: input, shape index: {}]
  %s5 = inlined_call_operand.hbm [shape: f32[1,384], index: 5, kind: input, shape index: {}]
  %s6 = inlined_call_operand.hbm [shape: bf16[384,2304], index: 6, kind: input, shape index: {}]
  %s7 = inlined_call_operand.hbm [shape: f32[1,2304], index: 7, kind: input, shape index: {}]
  %s8 = inlined_call_operand.hbm [shape: f32[4,2304], index: 8, kind: output, shape index: {0}]
  %s9 = inlined_call_operand.hbm [shape: f32[4,384], index: 9, kind: output, shape index: {1}]
  %10 = xla_tuple %s8, %s9
  %s11 = sld [smem:[#allocation0]]
  $region105: #{ada_layer_norm_single.1} parent=0
    _
  %s13 = ssub.s32 1, %s11
  %s14 = scalar_select 0, %s13, %s11
  $region1: #{ada_layer_norm_single.1} parent=0
    #allocation3 [shape = 'u8[512]{0}', space=vmem, size = 0x400, scoped, tag = 'input window, operand 1, single buffered']
    #allocation4 [shape = 's32[2]{0}', space=sflag, size = 0x8, scoped, tag = 'scoped memory for ada_layer_norm_single.1']
    #allocation5 [shape = 's32[2]{0}', space=sflag, size = 0x8, scoped, tag = 'scoped memory for ada_layer_norm_single.1']
    #allocation6 [shape = 'u8[393216]{0}', space=vmem, size = 0x60000, scoped, tag = 'input window, operand 2, single buffered']
    #allocation7 [shape = 's32[1]{0}', space=sflag, size = 0x4, scoped, tag = 'scoped memory for ada_layer_norm_single.1']
    #allocation8 [shape = 'u8[1536]{0}', space=vmem, size = 0x800, scoped, tag = 'input window, operand 3, single buffered']
    #allocation9 [shape = 'u8[294912]{0}', space=vmem, size = 0x48000, scoped, tag = 'input window, operand 4, single buffered']
    #allocation10 [shape = 's32[1]{0}', space=sflag, size = 0x4, scoped, tag = 'scoped memory for ada_layer_norm_single.1']
    #allocation11 [shape = 'u8[1536]{0}', space=vmem, size = 0x800, scoped, tag = 'input window, operand 5, single buffered']
    #allocation12 [shape = 'u8[1179648]{0}', space=vmem, size = 0x120000, scoped, tag = 'input window, operand 6']
    #allocation13 [shape = 's32[2]{0}', space=sflag, size = 0x8, scoped, tag = 'scoped memory for ada_layer_norm_single.1']
    #allocation14 [shape = 'u8[6144]{0}', space=vmem, size = 0x1800, scoped, tag = 'input window, operand 7']
    #allocation15 [shape = 'u8[24576]{0}', space=vmem, size = 0x6000, scoped, tag = 'output window, operand 0']
    #allocation16 [shape = 'u8[6144]{0}', space=vmem, size = 0x1800, scoped, tag = 'output window, operand 1, single buffered']
    #allocation17 [shape = 's32[1]{0}', space=sflag, size = 0x4, scoped, tag = 'scoped memory for ada_layer_norm_single.1']
    %15 = vsyncpa [#allocation4], 0
    %16 = vsyncpa [#allocation7], 0
    %17 = vsyncpa [#allocation10], 0
    %18 = vsyncpa [#allocation13], 0
    %s19 = scalar_lea.sflag [#allocation13], 1
    %20 = vsyncpa %s19, 0
    %21 = vsyncpa [#allocation5], 0
    %s22 = scalar_lea.sflag [#allocation5], 1
    %23 = vsyncpa %s22, 0
    %24 = vsyncpa [#allocation17], 0
    loop: start=0, step=1, limit=5
    $region2: #{ada_layer_norm_single.1} parent=1 // loop_pre_header
      _
    $region3: #{ada_layer_norm_single.1} parent=1 // loop_header
      %s26 = sphi 0, %s30
      %p27 = scmp.ge.s32.totalorder %s26, 5
      %s34 = sphi 0, %s34
      %s36 = sphi 0, %s34
      %s37 = sphi 0, %s36
      %s51 = sphi 0, %s37
      %s55 = sphi 0, %s55
      %s57 = sphi 0, %s55
      %s58 = sphi 0, %s57
      %s72 = sphi 0, %s58
      %s76 = sphi 0, %s76
      %s78 = sphi 0, %s76
      %s79 = sphi 0, %s78
      %s93 = sphi 0, %s79
      %s97 = sphi 0, %s97
      %s99 = sphi 0, %s97
      %s100 = sphi 0, %s99
      %s114 = sphi 0, %s100
      %s118 = sphi 0, %s118
      %s120 = sphi 0, %s118
      %s121 = sphi 0, %s120
      %s135 = sphi 0, %s121
      %s139 = sphi 0, %s139
      %s141 = sphi 0, %s139
      %s142 = sphi 0, %s141
      %s156 = sphi 0, %s142
      %s162 = sphi 0, %s164
      %s165 = sphi 0, %s162
      %s166 = sphi 0, %s165
      %s182 = sphi 0, %s166
      %s188 = sphi 0, %s190
      %s191 = sphi 0, %s188
      %s192 = sphi 0, %s191
      %s208 = sphi 0, %s192
      %s214 = sphi 0, %s216
      %s217 = sphi 0, %s214
      %s218 = sphi 0, %s217
      %s234 = sphi 0, %s218
      %s238 = sphi 0, %s238
      %s240 = sphi 0, %s238
      %s241 = sphi 0, %s240
      %s255 = sphi 0, %s241
    $region4: #{ada_layer_norm_single.1} parent=1 // loop_header_branch
      %29 = sbr.rel (%p27) target = $region8
    $region5: #{ada_layer_norm_single.1} parent=1 // loop_body
      %s31 = ssub.s32 %s26, 1
      %s32 = ssub.s32 %s26, 2
      %s33 = sadd.s32 %s26, 1
      %s35 = sadd.s32 %s34, 1
      %p38 = scmp.eq.s32.totalorder %s26, 2
      %p39 = scmp.ne.s32.totalorder %s34, %s36
      %p40 = scmp.eq.s32.totalorder %s26, 0
      %p41 = por %p39, %p40
      %p42 = scmp.ne.s32.totalorder %s34, %s36
      %p43 = scmp.eq.s32.totalorder %s31, 2
      %p44 = por %p42, %p43
      %p45 = scmp.ne.s32.totalorder %s36, %s37
      %p46 = scmp.eq.s32.totalorder %s31, 0
      %p47 = por %p45, %p46
      %p48 = scmp.ne.s32.totalorder %s36, %s37
      %p49 = scmp.eq.s32.totalorder %s32, 2
      %p50 = por %p48, %p49
      %p52 = scmp.ne.s32.totalorder %s37, %s51
      %p53 = scmp.eq.s32.totalorder %s32, 0
      %p54 = por %p52, %p53
      %s56 = sadd.s32 %s55, 1
      %p59 = scmp.eq.s32.totalorder %s26, 2
      %p60 = scmp.ne.s32.totalorder %s55, %s57
      %p61 = scmp.eq.s32.totalorder %s26, 0
      %p62 = por %p60, %p61
      %p63 = scmp.ne.s32.totalorder %s55, %s57
      %p64 = scmp.eq.s32.totalorder %s31, 2
      %p65 = por %p63, %p64
      %p66 = scmp.ne.s32.totalorder %s57, %s58
      %p67 = scmp.eq.s32.totalorder %s31, 0
      %p68 = por %p66, %p67
      %p69 = scmp.ne.s32.totalorder %s57, %s58
      %p70 = scmp.eq.s32.totalorder %s32, 2
      %p71 = por %p69, %p70
      %p73 = scmp.ne.s32.totalorder %s58, %s72
      %p74 = scmp.eq.s32.totalorder %s32, 0
      %p75 = por %p73, %p74
      %s77 = sadd.s32 %s76, 1
      %p80 = scmp.eq.s32.totalorder %s26, 2
      %p81 = scmp.ne.s32.totalorder %s76, %s78
      %p82 = scmp.eq.s32.totalorder %s26, 0
      %p83 = por %p81, %p82
      %p84 = scmp.ne.s32.totalorder %s76, %s78
      %p85 = scmp.eq.s32.totalorder %s31, 2
      %p86 = por %p84, %p85
      %p87 = scmp.ne.s32.totalorder %s78, %s79
      %p88 = scmp.eq.s32.totalorder %s31, 0
      %p89 = por %p87, %p88
      %p90 = scmp.ne.s32.totalorder %s78, %s79
      %p91 = scmp.eq.s32.totalorder %s32, 2
      %p92 = por %p90, %p91
      %p94 = scmp.ne.s32.totalorder %s79, %s93
      %p95 = scmp.eq.s32.totalorder %s32, 0
      %p96 = por %p94, %p95
      %s98 = sadd.s32 %s97, 1
      %p101 = scmp.eq.s32.totalorder %s26, 2
      %p102 = scmp.ne.s32.totalorder %s97, %s99
      %p103 = scmp.eq.s32.totalorder %s26, 0
      %p104 = por %p102, %p103
      %p105 = scmp.ne.s32.totalorder %s97, %s99
      %p106 = scmp.eq.s32.totalorder %s31, 2
      %p107 = por %p105, %p106
      %p108 = scmp.ne.s32.totalorder %s99, %s100
      %p109 = scmp.eq.s32.totalorder %s31, 0
      %p110 = por %p108, %p109
      %p111 = scmp.ne.s32.totalorder %s99, %s100
      %p112 = scmp.eq.s32.totalorder %s32, 2
      %p113 = por %p111, %p112
      %p115 = scmp.ne.s32.totalorder %s100, %s114
      %p116 = scmp.eq.s32.totalorder %s32, 0
      %p117 = por %p115, %p116
      %s119 = sadd.s32 %s118, 1
      %p122 = scmp.eq.s32.totalorder %s26, 2
      %p123 = scmp.ne.s32.totalorder %s118, %s120
      %p124 = scmp.eq.s32.totalorder %s26, 0
      %p125 = por %p123, %p124
      %p126 = scmp.ne.s32.totalorder %s118, %s120
      %p127 = scmp.eq.s32.totalorder %s31, 2
      %p128 = por %p126, %p127
      %p129 = scmp.ne.s32.totalorder %s120, %s121
      %p130 = scmp.eq.s32.totalorder %s31, 0
      %p131 = por %p129, %p130
      %p132 = scmp.ne.s32.totalorder %s120, %s121
      %p133 = scmp.eq.s32.totalorder %s32, 2
      %p134 = por %p132, %p133
      %p136 = scmp.ne.s32.totalorder %s121, %s135
      %p137 = scmp.eq.s32.totalorder %s32, 0
      %p138 = por %p136, %p137
      %s140 = sadd.s32 %s139, 1
      %p143 = scmp.eq.s32.totalorder %s26, 2
      %p144 = scmp.ne.s32.totalorder %s139, %s141
      %p145 = scmp.eq.s32.totalorder %s26, 0
      %p146 = por %p144, %p145
      %p147 = scmp.ne.s32.totalorder %s139, %s141
      %p148 = scmp.eq.s32.totalorder %s31, 2
      %p149 = por %p147, %p148
      %p150 = scmp.ne.s32.totalorder %s141, %s142
      %p151 = scmp.eq.s32.totalorder %s31, 0
      %p152 = por %p150, %p151
      %p153 = scmp.ne.s32.totalorder %s141, %s142
      %p154 = scmp.eq.s32.totalorder %s32, 2
      %p155 = por %p153, %p154
      %p157 = scmp.ne.s32.totalorder %s142, %s156
      %p158 = scmp.eq.s32.totalorder %s32, 0
      %p159 = por %p157, %p158
      %s160 = ssub.s32 %s26, %s33
      %p161 = scmp.eq.s32.totalorder %s160, 0
      %s163 = sadd.s32 %s162, 1
      %s164 = scalar_select %p161, %s162, %s163
      %p167 = pneg %p161
      %p168 = scmp.eq.s32.totalorder %s26, 2
      %p169 = por %p167, %p168
      %p170 = scmp.ne.s32.totalorder %s162, %s165
      %p171 = scmp.eq.s32.totalorder %s26, 0
      %p172 = por %p170, %p171
      %p173 = scmp.ne.s32.totalorder %s162, %s165
      %p174 = scmp.eq.s32.totalorder %s31, 2
      %p175 = por %p173, %p174
      %p176 = scmp.ne.s32.totalorder %s165, %s166
      %p177 = scmp.eq.s32.totalorder %s31, 0
      %p178 = por %p176, %p177
      %p179 = scmp.ne.s32.totalorder %s165, %s166
      %p180 = scmp.eq.s32.totalorder %s32, 2
      %p181 = por %p179, %p180
      %p183 = scmp.ne.s32.totalorder %s166, %s182
      %p184 = scmp.eq.s32.totalorder %s32, 0
      %p185 = por %p183, %p184
      %s186 = ssub.s32 %s26, %s33
      %p187 = scmp.eq.s32.totalorder %s186, 0
      %s189 = sadd.s32 %s188, 1
      %s190 = scalar_select %p187, %s188, %s189
      %p193 = pneg %p187
      %p194 = scmp.eq.s32.totalorder %s26, 2
      %p195 = por %p193, %p194
      %p196 = scmp.ne.s32.totalorder %s188, %s191
      %p197 = scmp.eq.s32.totalorder %s26, 0
      %p198 = por %p196, %p197
      %p199 = scmp.ne.s32.totalorder %s188, %s191
      %p200 = scmp.eq.s32.totalorder %s31, 2
      %p201 = por %p199, %p200
      %p202 = scmp.ne.s32.totalorder %s191, %s192
      %p203 = scmp.eq.s32.totalorder %s31, 0
      %p204 = por %p202, %p203
      %p205 = scmp.ne.s32.totalorder %s191, %s192
      %p206 = scmp.eq.s32.totalorder %s32, 2
      %p207 = por %p205, %p206
      %p209 = scmp.ne.s32.totalorder %s192, %s208
      %p210 = scmp.eq.s32.totalorder %s32, 0
      %p211 = por %p209, %p210
      %s212 = ssub.s32 %s26, %s33
      %p213 = scmp.eq.s32.totalorder %s212, 0
      %s215 = sadd.s32 %s214, 1
      %s216 = scalar_select %p213, %s214, %s215
      %p219 = pneg %p213
      %p220 = scmp.eq.s32.totalorder %s26, 2
      %p221 = por %p219, %p220
      %p222 = scmp.ne.s32.totalorder %s214, %s217
      %p223 = scmp.eq.s32.totalorder %s26, 0
      %p224 = por %p222, %p223
      %p225 = scmp.ne.s32.totalorder %s214, %s217
      %p226 = scmp.eq.s32.totalorder %s31, 2
      %p227 = por %p225, %p226
      %p228 = scmp.ne.s32.totalorder %s217, %s218
      %p229 = scmp.eq.s32.totalorder %s31, 0
      %p230 = por %p228, %p229
      %p231 = scmp.ne.s32.totalorder %s217, %s218
      %p232 = scmp.eq.s32.totalorder %s32, 2
      %p233 = por %p231, %p232
      %p235 = scmp.ne.s32.totalorder %s218, %s234
      %p236 = scmp.eq.s32.totalorder %s32, 0
      %p237 = por %p235, %p236
      %s239 = sadd.s32 %s238, 1
      %p242 = scmp.eq.s32.totalorder %s26, 2
      %p243 = scmp.ne.s32.totalorder %s238, %s240
      %p244 = scmp.eq.s32.totalorder %s26, 0
      %p245 = por %p243, %p244
      %p246 = scmp.ne.s32.totalorder %s238, %s240
      %p247 = scmp.eq.s32.totalorder %s31, 2
      %p248 = por %p246, %p247
      %p249 = scmp.ne.s32.totalorder %s240, %s241
      %p250 = scmp.eq.s32.totalorder %s31, 0
      %p251 = por %p249, %p250
      %p252 = scmp.ne.s32.totalorder %s240, %s241
      %p253 = scmp.eq.s32.totalorder %s32, 2
      %p254 = por %p252, %p253
      %p256 = scmp.ne.s32.totalorder %s241, %s255
      %p257 = scmp.eq.s32.totalorder %s32, 0
      %p258 = por %p256, %p257
      %p259 = scmp.le.s32.totalorder 1, %s26
      %p260 = scmp.lt.s32.totalorder %s26, 4
      %p261 = pnand %p259, %p260
      %p262 = pneg %p261
      // Predicated region
      $region9: #{ada_layer_norm_single.1} parent=5 // pred_check
        _
      $region10: #{ada_layer_norm_single.1} parent=5 // pred_check_branch
        %264 = sbr.rel (%p261) target = $region12
      $region11: #{ada_layer_norm_single.1} parent=5 // pred_region
        %s265 = ssub.s32 %s26, 1
        // Predicated region
        $region13: #{ada_layer_norm_single.1} parent=11 // pred_check
          %p266 = pneg %p47
        $region14: #{ada_layer_norm_single.1} parent=11 // pred_check_branch
          %268 = sbr.rel (%p266) target = $region16
        $region15: #{ada_layer_norm_single.1} parent=11 // pred_region
          _
        $region16: #{ada_layer_norm_single.1} parent=11 // pred_fallthru
          _
        // Predicated region
        $region17: #{ada_layer_norm_single.1} parent=11 // pred_check
          %p269 = pneg %p68
        $region18: #{ada_layer_norm_single.1} parent=11 // pred_check_branch
          %271 = sbr.rel (%p269) target = $region20
        $region19: #{ada_layer_norm_single.1} parent=11 // pred_region
          %s273 = ssub.s32 16, 16
          %274 = vsyncadd [#allocation4], %s273
          %s276 = sshll.u32 [#allocation3], 4
          %s277 = int_to_ptr.vmem [resolvable:$true] %s276
          %279 = dma.hbm_to_vmem [thread:$0]  %s1, 16, %s277, [#allocation4]
        $region20: #{ada_layer_norm_single.1} parent=11 // pred_fallthru
          _
        // Predicated region
        $region21: #{ada_layer_norm_single.1} parent=11 // pred_check
          %p280 = pneg %p89
        $region22: #{ada_layer_norm_single.1} parent=11 // pred_check_branch
          %282 = sbr.rel (%p280) target = $region24
        $region23: #{ada_layer_norm_single.1} parent=11 // pred_region
          %s284 = ssub.s32 12288, 12288
          %285 = vsyncadd [#allocation7], %s284
          %s286 = sshll.u32 [#allocation6], 4
          %s287 = int_to_ptr.vmem [resolvable:$true] %s286
          %292 = dma.hbm_to_vmem [thread:$0]  %s2, 12288, %s287, [#allocation7], 384, 384, 24
        $region24: #{ada_layer_norm_single.1} parent=11 // pred_fallthru
          _
        // Predicated region
        $region25: #{ada_layer_norm_single.1} parent=11 // pred_check
          %p293 = pneg %p110
        $region26: #{ada_layer_norm_single.1} parent=11 // pred_check_branch
          %295 = sbr.rel (%p293) target = $region28
        $region27: #{ada_layer_norm_single.1} parent=11 // pred_region
          %s297 = ssub.s32 48, 48
          %298 = vsyncadd [#allocation7], %s297
          %s300 = sshll.u32 [#allocation8], 4
          %s301 = int_to_ptr.vmem [resolvable:$true] %s300
          %303 = dma.hbm_to_vmem [thread:$0]  %s3, 48, %s301, [#allocation7]
        $region28: #{ada_layer_norm_single.1} parent=11 // pred_fallthru
          _
        // Predicated region
        $region29: #{ada_layer_norm_single.1} parent=11 // pred_check
          %p304 = pneg %p131
        $region30: #{ada_layer_norm_single.1} parent=11 // pred_check_branch
          %306 = sbr.rel (%p304) target = $region32
        $region31: #{ada_layer_norm_single.1} parent=11 // pred_region
          %s308 = ssub.s32 9216, 9216
          %309 = vsyncadd [#allocation10], %s308
          %s310 = sshll.u32 [#allocation9], 4
          %s311 = int_to_ptr.vmem [resolvable:$true] %s310
          %316 = dma.hbm_to_vmem [thread:$0]  %s4, 9216, %s311, [#allocation10], 192, 192, 12
        $region32: #{ada_layer_norm_single.1} parent=11 // pred_fallthru
          _
        // Predicated region
        $region33: #{ada_layer_norm_single.1} parent=11 // pred_check
          %p317 = pneg %p152
        $region34: #{ada_layer_norm_single.1} parent=11 // pred_check_branch
          %319 = sbr.rel (%p317) target = $region36
        $region35: #{ada_layer_norm_single.1} parent=11 // pred_region
          %s321 = ssub.s32 48, 48
          %322 = vsyncadd [#allocation10], %s321
          %s324 = sshll.u32 [#allocation11], 4
          %s325 = int_to_ptr.vmem [resolvable:$true] %s324
          %327 = dma.hbm_to_vmem [thread:$0]  %s5, 48, %s325, [#allocation10]
        $region36: #{ada_layer_norm_single.1} parent=11 // pred_fallthru
          _
      $region12: #{ada_layer_norm_single.1} parent=5 // pred_fallthru
        _
      %p328 = scmp.lt.s32.totalorder %s26, 3
      // Predicated region
      $region37: #{ada_layer_norm_single.1} parent=5 // pred_check
        %p329 = pneg %p328
      $region38: #{ada_layer_norm_single.1} parent=5 // pred_check_branch
        %331 = sbr.rel (%p329) target = $region40
      $region39: #{ada_layer_norm_single.1} parent=5 // pred_region
        // Predicated region
        $region41: #{ada_layer_norm_single.1} parent=39 // pred_check
          %p332 = pneg %p172
        $region42: #{ada_layer_norm_single.1} parent=39 // pred_check_branch
          %334 = sbr.rel (%p332) target = $region44
        $region43: #{ada_layer_norm_single.1} parent=39 // pred_region
          %s335 = sand.u32 %s26, 1
          %s336 = scalar_lea.sflag [#allocation13], %s335
          %s337 = sand.u32 %s162, 1
          %s338 = smul.addr %s337, 1152
          %s339 = scalar_lea.vmem [#allocation12], %s338
          %s340 = smul.u32 6, %s26
          %s342 = ssub.s32 18432, 18432
          %343 = vsyncadd %s336, %s342
          %s344 = smul.addr %s340, 64
          %s345 = scalar_lea.hbm %s6, %s344
          %s346 = sshll.u32 %s339, 4
          %s347 = int_to_ptr.vmem [resolvable:$true] %s346
          %352 = dma.hbm_to_vmem [thread:$0]  %s345, 18432, %s347, %s336, 1152, 384, 24
        $region44: #{ada_layer_norm_single.1} parent=39 // pred_fallthru
          _
        // Predicated region
        $region45: #{ada_layer_norm_single.1} parent=39 // pred_check
          %p353 = pneg %p198
        $region46: #{ada_layer_norm_single.1} parent=39 // pred_check_branch
          %355 = sbr.rel (%p353) target = $region48
        $region47: #{ada_layer_norm_single.1} parent=39 // pred_region
          %s356 = sand.u32 %s26, 1
          %s357 = scalar_lea.sflag [#allocation13], %s356
          %s358 = sand.u32 %s188, 1
          %s359 = smul.addr %s358, 6
          %s360 = scalar_lea.vmem [#allocation14], %s359
          %s361 = smul.u32 6, %s26
          %s363 = ssub.s32 96, 96
          %364 = vsyncadd %s357, %s363
          %s365 = smul.addr %s361, 16
          %s366 = scalar_lea.hbm %s7, %s365
          %s368 = sshll.u32 %s360, 4
          %s369 = int_to_ptr.vmem [resolvable:$true] %s368
          %371 = dma.hbm_to_vmem [thread:$0]  %s366, 96, %s369, %s357
        $region48: #{ada_layer_norm_single.1} parent=39 // pred_fallthru
          _
      $region40: #{ada_layer_norm_single.1} parent=5 // pred_fallthru
        _
      %p372 = scmp.le.s32.totalorder 1, %s26
      %p373 = scmp.lt.s32.totalorder %s26, 4
      %p374 = pnand %p372, %p373
      %p375 = pneg %p374
      // Predicated region
      $region49: #{ada_layer_norm_single.1} parent=5 // pred_check
        _
      $region50: #{ada_layer_norm_single.1} parent=5 // pred_check_branch
        %377 = sbr.rel (%p374) target = $region52
      $region51: #{ada_layer_norm_single.1} parent=5 // pred_region
        %s378 = ssub.s32 %s26, 1
        // Predicated region
        $region53: #{ada_layer_norm_single.1} parent=51 // pred_check
          %p379 = pneg %p68
        $region54: #{ada_layer_norm_single.1} parent=51 // pred_check_branch
          %381 = sbr.rel (%p379) target = $region56
        $region55: #{ada_layer_norm_single.1} parent=51 // pred_region
          %382 = dma.done [#allocation4], 16
        $region56: #{ada_layer_norm_single.1} parent=51 // pred_fallthru
          _
        // Predicated region
        $region57: #{ada_layer_norm_single.1} parent=51 // pred_check
          %p383 = pneg %p89
        $region58: #{ada_layer_norm_single.1} parent=51 // pred_check_branch
          %385 = sbr.rel (%p383) target = $region60
        $region59: #{ada_layer_norm_single.1} parent=51 // pred_region
          %386 = dma.done [#allocation7], 12288
        $region60: #{ada_layer_norm_single.1} parent=51 // pred_fallthru
          _
        // Predicated region
        $region61: #{ada_layer_norm_single.1} parent=51 // pred_check
          %p387 = pneg %p110
        $region62: #{ada_layer_norm_single.1} parent=51 // pred_check_branch
          %389 = sbr.rel (%p387) target = $region64
        $region63: #{ada_layer_norm_single.1} parent=51 // pred_region
          %390 = dma.done [#allocation7], 48
        $region64: #{ada_layer_norm_single.1} parent=51 // pred_fallthru
          _
        // Predicated region
        $region65: #{ada_layer_norm_single.1} parent=51 // pred_check
          %p391 = pneg %p131
        $region66: #{ada_layer_norm_single.1} parent=51 // pred_check_branch
          %393 = sbr.rel (%p391) target = $region68
        $region67: #{ada_layer_norm_single.1} parent=51 // pred_region
          %394 = dma.done [#allocation10], 9216
        $region68: #{ada_layer_norm_single.1} parent=51 // pred_fallthru
          _
        // Predicated region
        $region69: #{ada_layer_norm_single.1} parent=51 // pred_check
          %p395 = pneg %p152
        $region70: #{ada_layer_norm_single.1} parent=51 // pred_check_branch
          %397 = sbr.rel (%p395) target = $region72
        $region71: #{ada_layer_norm_single.1} parent=51 // pred_region
          %398 = dma.done [#allocation10], 48
        $region72: #{ada_layer_norm_single.1} parent=51 // pred_fallthru
          _
        %s399 = sand.u32 %s31, 1
        %s400 = scalar_lea.sflag [#allocation13], %s399
        %s401 = sand.u32 %s165, 1
        %s402 = smul.addr %s401, 1152
        %s403 = scalar_lea.vmem [#allocation12], %s402
        // Predicated region
        $region73: #{ada_layer_norm_single.1} parent=51 // pred_check
          %p404 = pneg %p178
        $region74: #{ada_layer_norm_single.1} parent=51 // pred_check_branch
          %406 = sbr.rel (%p404) target = $region76
        $region75: #{ada_layer_norm_single.1} parent=51 // pred_region
          %407 = dma.done %s400, 18432
        $region76: #{ada_layer_norm_single.1} parent=51 // pred_fallthru
          _
        %s408 = sand.u32 %s31, 1
        %s409 = scalar_lea.sflag [#allocation13], %s408
        %s410 = sand.u32 %s191, 1
        %s411 = smul.addr %s410, 6
        %s412 = scalar_lea.vmem [#allocation14], %s411
        // Predicated region
        $region77: #{ada_layer_norm_single.1} parent=51 // pred_check
          %p413 = pneg %p204
        $region78: #{ada_layer_norm_single.1} parent=51 // pred_check_branch
          %415 = sbr.rel (%p413) target = $region80
        $region79: #{ada_layer_norm_single.1} parent=51 // pred_region
          %416 = dma.done %s409, 96
        $region80: #{ada_layer_norm_single.1} parent=51 // pred_fallthru
          _
        %p417 = pneg %p47
        %p418 = pneg %p44
        %p419 = pneg %p68
        %p420 = pneg %p65
        %p421 = pneg %p89
        %p422 = pneg %p86
        %p423 = pneg %p110
        %p424 = pneg %p107
        %p425 = pneg %p131
        %p426 = pneg %p128
        %p427 = pneg %p152
        %p428 = pneg %p149
        %s429 = sand.u32 %s31, 1
        %s430 = scalar_lea.sflag [#allocation13], %s429
        %s431 = sand.u32 %s165, 1
        %s432 = smul.addr %s431, 1152
        %s433 = scalar_lea.vmem [#allocation12], %s432
        %p434 = pneg %p178
        %p435 = pneg %p175
        %s436 = sand.u32 %s31, 1
        %s437 = scalar_lea.sflag [#allocation13], %s436
        %s438 = sand.u32 %s191, 1
        %s439 = smul.addr %s438, 6
        %s440 = scalar_lea.vmem [#allocation14], %s439
        %p441 = pneg %p204
        %p442 = pneg %p201
        %p443 = pneg %p230
        %p444 = pneg %p227
        %s445 = sand.u32 %s217, 1
        %s446 = scalar_lea.sflag [#allocation5], %s445
        %s447 = sand.u32 %s217, 1
        %s448 = smul.addr %s447, 24
        %s449 = scalar_lea.vmem [#allocation15], %s448
        %p450 = pneg %p251
        %p451 = pneg %p248
        %s452 = smul.u32 6, %s31
        %s453 = smul.u32 6, %s31
        %s454 = smul.u32 6, %s31
        %p456 = scmp.eq.s32.totalorder %s31, 0
        // Predicated region
        $region81: #{ada_layer_norm_single.1} parent=51 // pred_check
          %p457 = pneg %p456
        $region82: #{ada_layer_norm_single.1} parent=51 // pred_check_branch
          %459 = sbr.rel (%p457) target = $region84
        $region83: #{ada_layer_norm_single.1} parent=51 // pred_region
          %v460 = vld [vmem:[%s0] sm:$0xf]
          %v461 = vld [vmem:[#allocation3] sm:$0x1]
          %463 = vset.pattern.permute.xlu0 0
          %464 = vperm.xlu0 %463, %v460
          %v465 = vpop.permute.xlu0 %464
          %v468 = vlaneseq
          %v469 = vshrl.u32 %v468, 7
          %v470 = vsub.s32 0, %v469
          %v471 = vrot.slane %v461, %v470
          %v473 = vmul.f32 %v465, %v471
          %v474 = vand.u32 2147483647, %v473
          %vm475 = vcmp.le.f32.partialorder %v474, 0.7853982
          %vm476 = vcmp.lt.s32.totalorder %v473, 0
          %v477 = vand.u32 %v473, 2139095040
          %v478 = vshrl.u32 %v477, 23
          %v479 = vsub.s32 %v478, 127
          %v480 = vand.u32 2147483647, %v473
          %v481 = vand.u32 %v480, 8388607
          %v482 = vor.u32 %v481, 8388608
          %v483 = vsub.s32 0, %v482
          %v484 = vadd.s32 %v479, 1
          %vm485 = vcmp.gt.s32.totalorder %v484, 0
          %v486 = vsel %vm485, %v484, 0
          %v487 = vshrl.u32 %v486, 5
          %v488 = vand.u32 %v486, 31
          %v489 = vsub.s32 32, %v488
          %v490 = vshrl.u32 683565275, %v489
          %v491 = vshll.u32 683565275, %v488
          %v492 = vshrl.u32 2475754826, %v489
          %v493 = vor.u32 %v491, %v492
          %v494 = vshll.u32 2475754826, %v488
          %v495 = vshrl.u32 2131351028, %v489
          %v496 = vor.u32 %v494, %v495
          %v497 = vshll.u32 2131351028, %v488
          %v498 = vshrl.u32 2102212464, %v489
          %v499 = vor.u32 %v497, %v498
          %v500 = vshll.u32 2102212464, %v488
          %v501 = vshrl.u32 920167782, %v489
          %v502 = vor.u32 %v500, %v501
          %v503 = vshll.u32 920167782, %v488
          %v504 = vshrl.u32 1326507024, %v489
          %v505 = vor.u32 %v503, %v504
          %vm506 = vcmp.lt.s32.totalorder %v487, 1
          %vm507 = vcmp.lt.s32.totalorder %v487, 2
          %vm508 = vcmp.lt.s32.totalorder %v487, 3
          %vm509 = vcmp.lt.s32.totalorder %v487, 4
          %v510 = vsel %vm506, %v490, %v493
          %v511 = vsel %vm509, %v499, 2102212464
          %v512 = vsel %vm508, %v496, %v511
          %v513 = vsel %vm507, %v510, %v512
          %v514 = vsel %vm506, %v493, %v496
          %v515 = vsel %vm509, %v502, 920167782
          %v516 = vsel %vm508, %v499, %v515
          %v517 = vsel %vm507, %v514, %v516
          %v518 = vsel %vm506, %v496, %v499
          %v519 = vsel %vm509, %v505, 1326507024
          %v520 = vsel %vm508, %v502, %v519
          %v521 = vsel %vm507, %v518, %v520
          %v522 = vshll.u32 %v482, 8
          %v523 = vmul.u32.u64.compose %v522, %v521
          %v524 = vextract.low.u32 %v523
          %v525 = vextract.high.u32 %v523
          %v526 = vmul.u32.u64.compose %v522, %v517
          %v527 = vextract.low.u32 %v526
          %v528 = vextract.high.u32 %v526
          %v529 = vmul.u32 %v522, %v513
          %v530 = vadd.s32 %v525, %v527
          %vm531 = vc.u32 %v525, %v527
          %v532 = vadd.s32 %v528, 1
          %v533 = vsel %vm531, %v532, %v528
          %v534 = vadd.s32 %v529, %v533
          %v535 = vadd.s32 %v534, 536870912
          %v536 = vshrl.u32 %v535, 30
          %v537 = vshll.u32 %v536, 30
          %v538 = vsub.s32 %v534, %v537
          %vm539 = vcmp.lt.s32.totalorder %v538, 0
          %v540 = vsub.s32 0, %v538
          %v541 = vsel %vm539, %v540, %v538
          %v542 = vclz %v541
          %v543 = vsub.s32 %v542, 2
          %vm544 = vcmp.gt.s32.totalorder 0, %v543
          %v545 = vsel %vm544, 0, %v543
          %v546 = vsub.s32 32, %v545
          %v547 = vshll.u32 %v538, %v545
          %v548 = vshrl.u32 %v530, %v546
          %v549 = vor.u32 %v547, %v548
          %v550 = vsub.s32 4294967266, %v545
          %v551 = vadd.s32 %v550, 127
          %v552 = vshll.u32 %v551, 23
          %v553 = vor.u32 4788187, %v552
          %v554 = vand.u32 2147483647, %v553
          %v556 = vcvt.s32.f32 %v549
          %v557 = vmul.f32 %v556, %v554
          %v558 = vxor.u32 %v557, 2147483648
          %v559 = vsel %vm476, %v558, %v557
          %v560 = vsub.s32 4, %v536
          %v561 = vsel %vm476, %v560, %v536
          %v562 = vsel %vm475, %v473, %v559
          %v563 = vsel %vm475, 0, %v561
          %v564 = vcosq.f32.pop %v562
          %v565 = vsinq.f32.pop %v562
          %vm566 = vweird.f32 %v473
          %v567 = vand.u32 %v563, 3
          %vm568 = vcmp.lt.s32.totalorder %v567, 2
          %vm569 = vcmp.eq.s32.totalorder %v567, 0
          %v570 = vxor.u32 %v565, 2147483648
          %v571 = vsel %vm569, %v564, %v570
          %vm572 = vcmp.eq.s32.totalorder %v567, 2
          %v573 = vxor.u32 %v564, 2147483648
          %v574 = vsel %vm572, %v573, %v565
          %v575 = vsel %vm568, %v571, %v574
          %v576 = vsel %vm566, nan, %v575
          %v577 = vand.u32 2147483647, %v473
          %vm578 = vcmp.le.f32.partialorder %v577, 0.7853982
          %vm579 = vcmp.lt.s32.totalorder %v473, 0
          %v580 = vand.u32 %v473, 2139095040
          %v581 = vshrl.u32 %v580, 23
          %v582 = vsub.s32 %v581, 127
          %v583 = vand.u32 2147483647, %v473
          %v584 = vand.u32 %v583, 8388607
          %v585 = vor.u32 %v584, 8388608
          %v586 = vsub.s32 0, %v585
          %v587 = vadd.s32 %v582, 1
          %vm588 = vcmp.gt.s32.totalorder %v587, 0
          %v589 = vsel %vm588, %v587, 0
          %v590 = vshrl.u32 %v589, 5
          %v591 = vand.u32 %v589, 31
          %v592 = vsub.s32 32, %v591
          %v593 = vshrl.u32 683565275, %v592
          %v594 = vshll.u32 683565275, %v591
          %v595 = vshrl.u32 2475754826, %v592
          %v596 = vor.u32 %v594, %v595
          %v597 = vshll.u32 2475754826, %v591
          %v598 = vshrl.u32 2131351028, %v592
          %v599 = vor.u32 %v597, %v598
          %v600 = vshll.u32 2131351028, %v591
          %v601 = vshrl.u32 2102212464, %v592
          %v602 = vor.u32 %v600, %v601
          %v603 = vshll.u32 2102212464, %v591
          %v604 = vshrl.u32 920167782, %v592
          %v605 = vor.u32 %v603, %v604
          %v606 = vshll.u32 920167782, %v591
          %v607 = vshrl.u32 1326507024, %v592
          %v608 = vor.u32 %v606, %v607
          %vm609 = vcmp.lt.s32.totalorder %v590, 1
          %vm610 = vcmp.lt.s32.totalorder %v590, 2
          %vm611 = vcmp.lt.s32.totalorder %v590, 3
          %vm612 = vcmp.lt.s32.totalorder %v590, 4
          %v613 = vsel %vm609, %v593, %v596
          %v614 = vsel %vm612, %v602, 2102212464
          %v615 = vsel %vm611, %v599, %v614
          %v616 = vsel %vm610, %v613, %v615
          %v617 = vsel %vm609, %v596, %v599
          %v618 = vsel %vm612, %v605, 920167782
          %v619 = vsel %vm611, %v602, %v618
          %v620 = vsel %vm610, %v617, %v619
          %v621 = vsel %vm609, %v599, %v602
          %v622 = vsel %vm612, %v608, 1326507024
          %v623 = vsel %vm611, %v605, %v622
          %v624 = vsel %vm610, %v621, %v623
          %v625 = vshll.u32 %v585, 8
          %v626 = vmul.u32.u64.compose %v625, %v624
          %v627 = vextract.low.u32 %v626
          %v628 = vextract.high.u32 %v626
          %v629 = vmul.u32.u64.compose %v625, %v620
          %v630 = vextract.low.u32 %v629
          %v631 = vextract.high.u32 %v629
          %v632 = vmul.u32 %v625, %v616
          %v633 = vadd.s32 %v628, %v630
          %vm634 = vc.u32 %v628, %v630
          %v635 = vadd.s32 %v631, 1
          %v636 = vsel %vm634, %v635, %v631
          %v637 = vadd.s32 %v632, %v636
          %v638 = vadd.s32 %v637, 536870912
          %v639 = vshrl.u32 %v638, 30
          %v640 = vshll.u32 %v639, 30
          %v641 = vsub.s32 %v637, %v640
          %vm642 = vcmp.lt.s32.totalorder %v641, 0
          %v643 = vsub.s32 0, %v641
          %v644 = vsel %vm642, %v643, %v641
          %v645 = vclz %v644
          %v646 = vsub.s32 %v645, 2
          %vm647 = vcmp.gt.s32.totalorder 0, %v646
          %v648 = vsel %vm647, 0, %v646
          %v649 = vsub.s32 32, %v648
          %v650 = vshll.u32 %v641, %v648
          %v651 = vshrl.u32 %v633, %v649
          %v652 = vor.u32 %v650, %v651
          %v653 = vsub.s32 4294967266, %v648
          %v654 = vadd.s32 %v653, 127
          %v655 = vshll.u32 %v654, 23
          %v656 = vor.u32 4788187, %v655
          %v657 = vand.u32 2147483647, %v656
          %v659 = vcvt.s32.f32 %v652
          %v660 = vmul.f32 %v659, %v657
          %v661 = vxor.u32 %v660, 2147483648
          %v662 = vsel %vm579, %v661, %v660
          %v663 = vsub.s32 4, %v639
          %v664 = vsel %vm579, %v663, %v639
          %v665 = vsel %vm578, %v473, %v662
          %v666 = vsel %vm578, 0, %v664
          %v667 = vcosq.f32.pop %v665
          %v668 = vsinq.f32.pop %v665
          %vm669 = vweird.f32 %v473
          %v670 = vadd.s32 %v666, 3
          %v671 = vand.u32 %v670, 3
          %vm672 = vcmp.lt.s32.totalorder %v671, 2
          %vm673 = vcmp.eq.s32.totalorder %v671, 0
          %v674 = vxor.u32 %v668, 2147483648
          %v675 = vsel %vm673, %v667, %v674
          %vm676 = vcmp.eq.s32.totalorder %v671, 2
          %v677 = vxor.u32 %v667, 2147483648
          %v678 = vsel %vm676, %v677, %v668
          %v679 = vsel %vm672, %v675, %v678
          %v680 = vsel %vm669, nan, %v679
          %v681 = vld [vmem:[#allocation6] sm:$0xff]
          %v682 = vld [vmem:[#allocation6 + $0x8] sm:$0xff]
          %v683 = vld [vmem:[#allocation6 + $0x10] sm:$0xff]
          %v684 = vld [vmem:[#allocation6 + $0x18] sm:$0xff]
          %v685 = vld [vmem:[#allocation6 + $0x20] sm:$0xff]
          %v686 = vld [vmem:[#allocation6 + $0x28] sm:$0xff]
          %v687 = vld [vmem:[#allocation6 + $0x30] sm:$0xff]
          %v688 = vld [vmem:[#allocation6 + $0x38] sm:$0xff]
          %v689 = vld [vmem:[#allocation6 + $0x40] sm:$0xff]
          %v690 = vld [vmem:[#allocation6 + $0x48] sm:$0xff]
          %v691 = vld [vmem:[#allocation6 + $0x50] sm:$0xff]
          %v692 = vld [vmem:[#allocation6 + $0x58] sm:$0xff]
          %v693 = vld [vmem:[#allocation6 + $0x60] sm:$0xff]
          %v694 = vld [vmem:[#allocation6 + $0x68] sm:$0xff]
          %v695 = vld [vmem:[#allocation6 + $0x70] sm:$0xff]
          %v696 = vld [vmem:[#allocation6 + $0x78] sm:$0xff]
          %v697 = vld [vmem:[#allocation6 + $0x80] sm:$0xff]
          %v698 = vld [vmem:[#allocation6 + $0x88] sm:$0xff]
          %v699 = vld [vmem:[#allocation6 + $0x90] sm:$0xff]
          %v700 = vld [vmem:[#allocation6 + $0x98] sm:$0xff]
          %v701 = vld [vmem:[#allocation6 + $0xa0] sm:$0xff]
          %v702 = vld [vmem:[#allocation6 + $0xa8] sm:$0xff]
          %v703 = vld [vmem:[#allocation6 + $0xb0] sm:$0xff]
          %v704 = vld [vmem:[#allocation6 + $0xb8] sm:$0xff]
          %v705 = vld [vmem:[#allocation6 + $0xc0] sm:$0xff]
          %v706 = vld [vmem:[#allocation6 + $0xc8] sm:$0xff]
          %v707 = vld [vmem:[#allocation6 + $0xd0] sm:$0xff]
          %v708 = vld [vmem:[#allocation6 + $0xd8] sm:$0xff]
          %v709 = vld [vmem:[#allocation6 + $0xe0] sm:$0xff]
          %v710 = vld [vmem:[#allocation6 + $0xe8] sm:$0xff]
          %v711 = vld [vmem:[#allocation6 + $0xf0] sm:$0xff]
          %v712 = vld [vmem:[#allocation6 + $0xf8] sm:$0xff]
          %v713 = vld [vmem:[#allocation6 + $0x100] sm:$0xff]
          %v714 = vld [vmem:[#allocation6 + $0x108] sm:$0xff]
          %v715 = vld [vmem:[#allocation6 + $0x110] sm:$0xff]
          %v716 = vld [vmem:[#allocation6 + $0x118] sm:$0xff]
          %v717 = vld [vmem:[#allocation6 + $0x120] sm:$0xff]
          %v718 = vld [vmem:[#allocation6 + $0x128] sm:$0xff]
          %v719 = vld [vmem:[#allocation6 + $0x130] sm:$0xff]
          %v720 = vld [vmem:[#allocation6 + $0x138] sm:$0xff]
          %v721 = vld [vmem:[#allocation6 + $0x140] sm:$0xff]
          %v722 = vld [vmem:[#allocation6 + $0x148] sm:$0xff]
          %v723 = vld [vmem:[#allocation6 + $0x150] sm:$0xff]
          %v724 = vld [vmem:[#allocation6 + $0x158] sm:$0xff]
          %v725 = vld [vmem:[#allocation6 + $0x160] sm:$0xff]
          %v726 = vld [vmem:[#allocation6 + $0x168] sm:$0xff]
          %v727 = vld [vmem:[#allocation6 + $0x170] sm:$0xff]
          %v728 = vld [vmem:[#allocation6 + $0x178] sm:$0xff]
          %v729 = vld [vmem:[#allocation6 + $0x180] sm:$0xff]
          %v730 = vld [vmem:[#allocation6 + $0x188] sm:$0xff]
          %v731 = vld [vmem:[#allocation6 + $0x190] sm:$0xff]
          %v732 = vld [vmem:[#allocation6 + $0x198] sm:$0xff]
          %v733 = vld [vmem:[#allocation6 + $0x1a0] sm:$0xff]
          %v734 = vld [vmem:[#allocation6 + $0x1a8] sm:$0xff]
          %v735 = vld [vmem:[#allocation6 + $0x1b0] sm:$0xff]
          %v736 = vld [vmem:[#allocation6 + $0x1b8] sm:$0xff]
          %v737 = vld [vmem:[#allocation6 + $0x1c0] sm:$0xff]
          %v738 = vld [vmem:[#allocation6 + $0x1c8] sm:$0xff]
          %v739 = vld [vmem:[#allocation6 + $0x1d0] sm:$0xff]
          %v740 = vld [vmem:[#allocation6 + $0x1d8] sm:$0xff]
          %v741 = vld [vmem:[#allocation6 + $0x1e0] sm:$0xff]
          %v742 = vld [vmem:[#allocation6 + $0x1e8] sm:$0xff]
          %v743 = vld [vmem:[#allocation6 + $0x1f0] sm:$0xff]
          %v744 = vld [vmem:[#allocation6 + $0x1f8] sm:$0xff]
          %v745 = vld [vmem:[#allocation6 + $0x200] sm:$0xff]
          %v746 = vld [vmem:[#allocation6 + $0x208] sm:$0xff]
          %v747 = vld [vmem:[#allocation6 + $0x210] sm:$0xff]
          %v748 = vld [vmem:[#allocation6 + $0x218] sm:$0xff]
          %v749 = vld [vmem:[#allocation6 + $0x220] sm:$0xff]
          %v750 = vld [vmem:[#allocation6 + $0x228] sm:$0xff]
          %v751 = vld [vmem:[#allocation6 + $0x230] sm:$0xff]
          %v752 = vld [vmem:[#allocation6 + $0x238] sm:$0xff]
          %v753 = vld [vmem:[#allocation6 + $0x240] sm:$0xff]
          %v754 = vld [vmem:[#allocation6 + $0x248] sm:$0xff]
          %v755 = vld [vmem:[#allocation6 + $0x250] sm:$0xff]
          %v756 = vld [vmem:[#allocation6 + $0x258] sm:$0xff]
          %v757 = vld [vmem:[#allocation6 + $0x260] sm:$0xff]
          %v758 = vld [vmem:[#allocation6 + $0x268] sm:$0xff]
          %v759 = vld [vmem:[#allocation6 + $0x270] sm:$0xff]
          %v760 = vld [vmem:[#allocation6 + $0x278] sm:$0xff]
          %v761 = vld [vmem:[#allocation6 + $0x280] sm:$0xff]
          %v762 = vld [vmem:[#allocation6 + $0x288] sm:$0xff]
          %v763 = vld [vmem:[#allocation6 + $0x290] sm:$0xff]
          %v764 = vld [vmem:[#allocation6 + $0x298] sm:$0xff]
          %v765 = vld [vmem:[#allocation6 + $0x2a0] sm:$0xff]
          %v766 = vld [vmem:[#allocation6 + $0x2a8] sm:$0xff]
          %v767 = vld [vmem:[#allocation6 + $0x2b0] sm:$0xff]
          %v768 = vld [vmem:[#allocation6 + $0x2b8] sm:$0xff]
          %v769 = vld [vmem:[#allocation6 + $0x2c0] sm:$0xff]
          %v770 = vld [vmem:[#allocation6 + $0x2c8] sm:$0xff]
          %v771 = vld [vmem:[#allocation6 + $0x2d0] sm:$0xff]
          %v772 = vld [vmem:[#allocation6 + $0x2d8] sm:$0xff]
          %v773 = vld [vmem:[#allocation6 + $0x2e0] sm:$0xff]
          %v774 = vld [vmem:[#allocation6 + $0x2e8] sm:$0xff]
          %v775 = vld [vmem:[#allocation6 + $0x2f0] sm:$0xff]
          %v776 = vld [vmem:[#allocation6 + $0x2f8] sm:$0xff]
          %v777 = vld [vmem:[#allocation8] sm:$0x7]
          %v779 = vlaneseq
          %v780 = vshrl.u32 %v779, 7
          %v781 = vsub.s32 0, %v780
          %v782 = vrot.slane %v777, %v781
          %v783 = vlaneseq
          %v784 = vshrl.u32 %v783, 7
          %v785 = vsub.s32 1, %v784
          %v786 = vrot.slane %v777, %v785
          %v787 = vlaneseq
          %v788 = vshrl.u32 %v787, 7
          %v789 = vsub.s32 2, %v788
          %v790 = vrot.slane %v777, %v789
          %794 = vmatprep.subr.mxu0 %v682
          %795 = vmatpush1.msra.mxu0 %v681
          %796 = vmatprep.subr.mxu0 %v685
          %797 = vmatpush1.msra.mxu0 %v684
          %798 = vmatprep.subr.mxu0 %v688
          %799 = vmatpush1.msra.mxu0 %v687
          %800 = vmatprep.subr.mxu0 %v691
          %801 = vmatpush1.msra.mxu0 %v690
          %802 = vmatprep.subr.mxu0 %v694
          %803 = vmatpush1.msra.mxu0 %v693
          %804 = vmatprep.subr.mxu0 %v697
          %805 = vmatpush1.msra.mxu0 %v696
          %806 = vmatprep.subr.mxu0 %v700
          %807 = vmatpush1.msra.mxu0 %v699
          %808 = vmatprep.subr.mxu0 %v703
          %809 = vmatpush1.msra.mxu0 %v702
          %810 = vmatprep.subr.mxu0 %v706
          %811 = vmatpush1.msra.mxu0 %v705
          %812 = vmatprep.subr.mxu0 %v709
          %813 = vmatpush1.msra.mxu0 %v708
          %814 = vmatprep.subr.mxu0 %v712
          %815 = vmatpush1.msra.mxu0 %v711
          %816 = vmatprep.subr.mxu0 %v715
          %817 = vmatpush1.msra.mxu0 %v714
          %818 = vmatprep.subr.mxu0 %v718
          %819 = vmatpush1.msra.mxu0 %v717
          %820 = vmatprep.subr.mxu0 %v721
          %821 = vmatpush1.msra.mxu0 %v720
          %822 = vmatprep.subr.mxu0 %v724
          %823 = vmatpush1.msra.mxu0 %v723
          %824 = vmatprep.subr.mxu0 %v727
          %825 = vmatpush1.msra.mxu0 %v726
          %826 = vmatprep.subr.mxu0 %v730
          %827 = vmatpush1.msra.mxu0 %v729
          %828 = vmatprep.subr.mxu0 %v733
          %829 = vmatpush1.msra.mxu0 %v732
          %830 = vmatprep.subr.mxu0 %v736
          %831 = vmatpush1.msra.mxu0 %v735
          %832 = vmatprep.subr.mxu0 %v739
          %833 = vmatpush1.msra.mxu0 %v738
          %834 = vmatprep.subr.mxu0 %v742
          %835 = vmatpush1.msra.mxu0 %v741
          %836 = vmatprep.subr.mxu0 %v745
          %837 = vmatpush1.msra.mxu0 %v744
          %838 = vmatprep.subr.mxu0 %v748
          %839 = vmatpush1.msra.mxu0 %v747
          %840 = vmatprep.subr.mxu0 %v751
          %841 = vmatpush1.msra.mxu0 %v750
          %842 = vmatprep.subr.mxu0 %v754
          %843 = vmatpush1.msra.mxu0 %v753
          %844 = vmatprep.subr.mxu0 %v757
          %845 = vmatpush1.msra.mxu0 %v756
          %846 = vmatprep.subr.mxu0 %v760
          %847 = vmatpush1.msra.mxu0 %v759
          %848 = vmatprep.subr.mxu0 %v763
          %849 = vmatpush1.msra.mxu0 %v762
          %850 = vmatprep.subr.mxu0 %v766
          %851 = vmatpush1.msra.mxu0 %v765
          %852 = vmatprep.subr.mxu0 %v769
          %853 = vmatpush1.msra.mxu0 %v768
          %854 = vmatprep.subr.mxu0 %v772
          %855 = vmatpush1.msra.mxu0 %v771
          %856 = vmatprep.subr.mxu0 %v775
          %857 = vmatpush1.msra.mxu0 %v774
          %858 = vmatprep.mubr.f32.mxu0 %v680
          %859 = vmatmul.mubr.f32.gmra.mrb[0].mxu0 %v576
          %v860 = vpop.f32.mrb[0].mxu0
          %v861 = vadd.f32 %v782, %v860
          %v862 = vpop.f32.mrb[0].mxu0
          %v863 = vadd.f32 %v786, %v862
          %864 = vdwg.mxu0
          %865 = vmatprep.subr.mxu0 0.0
          %866 = vmatpush1.msra.mxu0 %v683
          %867 = vmatprep.subr.mxu0 0.0
          %868 = vmatpush1.msra.mxu0 %v686
          %869 = vmatprep.subr.mxu0 0.0
          %870 = vmatpush1.msra.mxu0 %v689
          %871 = vmatprep.subr.mxu0 0.0
          %872 = vmatpush1.msra.mxu0 %v692
          %873 = vmatprep.subr.mxu0 0.0
          %874 = vmatpush1.msra.mxu0 %v695
          %875 = vmatprep.subr.mxu0 0.0
          %876 = vmatpush1.msra.mxu0 %v698
          %877 = vmatprep.subr.mxu0 0.0
          %878 = vmatpush1.msra.mxu0 %v701
          %879 = vmatprep.subr.mxu0 0.0
          %880 = vmatpush1.msra.mxu0 %v704
          %881 = vmatprep.subr.mxu0 0.0
          %882 = vmatpush1.msra.mxu0 %v707
          %883 = vmatprep.subr.mxu0 0.0
          %884 = vmatpush1.msra.mxu0 %v710
          %885 = vmatprep.subr.mxu0 0.0
          %886 = vmatpush1.msra.mxu0 %v713
          %887 = vmatprep.subr.mxu0 0.0
          %888 = vmatpush1.msra.mxu0 %v716
          %889 = vmatprep.subr.mxu0 0.0
          %890 = vmatpush1.msra.mxu0 %v719
          %891 = vmatprep.subr.mxu0 0.0
          %892 = vmatpush1.msra.mxu0 %v722
          %893 = vmatprep.subr.mxu0 0.0
          %894 = vmatpush1.msra.mxu0 %v725
          %895 = vmatprep.subr.mxu0 0.0
          %896 = vmatpush1.msra.mxu0 %v728
          %897 = vmatprep.subr.mxu0 0.0
          %898 = vmatpush1.msra.mxu0 %v731
          %899 = vmatprep.subr.mxu0 0.0
          %900 = vmatpush1.msra.mxu0 %v734
          %901 = vmatprep.subr.mxu0 0.0
          %902 = vmatpush1.msra.mxu0 %v737
          %903 = vmatprep.subr.mxu0 0.0
          %904 = vmatpush1.msra.mxu0 %v740
          %905 = vmatprep.subr.mxu0 0.0
          %906 = vmatpush1.msra.mxu0 %v743
          %907 = vmatprep.subr.mxu0 0.0
          %908 = vmatpush1.msra.mxu0 %v746
          %909 = vmatprep.subr.mxu0 0.0
          %910 = vmatpush1.msra.mxu0 %v749
          %911 = vmatprep.subr.mxu0 0.0
          %912 = vmatpush1.msra.mxu0 %v752
          %913 = vmatprep.subr.mxu0 0.0
          %914 = vmatpush1.msra.mxu0 %v755
          %915 = vmatprep.subr.mxu0 0.0
          %916 = vmatpush1.msra.mxu0 %v758
          %917 = vmatprep.subr.mxu0 0.0
          %918 = vmatpush1.msra.mxu0 %v761
          %919 = vmatprep.subr.mxu0 0.0
          %920 = vmatpush1.msra.mxu0 %v764
          %921 = vmatprep.subr.mxu0 0.0
          %922 = vmatpush1.msra.mxu0 %v767
          %923 = vmatprep.subr.mxu0 0.0
          %924 = vmatpush1.msra.mxu0 %v770
          %925 = vmatprep.subr.mxu0 0.0
          %926 = vmatpush1.msra.mxu0 %v773
          %927 = vmatprep.subr.mxu0 0.0
          %928 = vmatpush1.msra.mxu0 %v776
          %929 = vmatprep.mubr.f32.mxu0 %v680
          %930 = vmatmul.mubr.f32.gmra.mrb[0].mxu0 %v576
          %v931 = vpop.f32.mrb[0].mxu0
          %v932 = vadd.f32 %v790, %v931
          %v933 = vpop.f32.mrb[0].mxu0
          %934 = vdwg.mxu0
          %v935 = vxor.u32 %v861, 2147483648
          %v936 = vxor.u32 %v863, 2147483648
          %v937 = vxor.u32 %v932, 2147483648
          %v938 = vmul.f32 %v935, 1.442695
          %v939 = vpow.pop %v938
          %v940 = vmul.f32 %v936, 1.442695
          %v941 = vpow.pop %v940
          %v942 = vmul.f32 %v937, 1.442695
          %v943 = vpow.pop %v942
          %v944 = vadd.f32 %v939, 1.0
          %v945 = vadd.f32 %v941, 1.0
          %v946 = vadd.f32 %v943, 1.0
          %v947 = vrcp.pop %v944
          %v948 = vmul.f32 1.0, %v947
          %v949 = vrcp.pop %v945
          %v950 = vmul.f32 1.0, %v949
          %v951 = vrcp.pop %v946
          %v952 = vmul.f32 1.0, %v951
          %v953 = vmul.f32 %v861, %v948
          %v954 = vmul.f32 %v863, %v950
          %v955 = vmul.f32 %v932, %v952
          %v956 = vpack.c.bf16 %v953, %v953
          %v957 = vpack.c.bf16 %v954, %v954
          %v958 = vpack.c.bf16 %v955, %v955
          %v959 = vld [vmem:[#allocation9] sm:$0xff]
          %v960 = vld [vmem:[#allocation9 + $0x8] sm:$0xf]
          %v961 = vld [vmem:[#allocation9 + $0xc] sm:$0xff]
          %v962 = vld [vmem:[#allocation9 + $0x14] sm:$0xf]
          %v963 = vld [vmem:[#allocation9 + $0x18] sm:$0xff]
          %v964 = vld [vmem:[#allocation9 + $0x20] sm:$0xf]
          %v965 = vld [vmem:[#allocation9 + $0x24] sm:$0xff]
          %v966 = vld [vmem:[#allocation9 + $0x2c] sm:$0xf]
          %v967 = vld [vmem:[#allocation9 + $0x30] sm:$0xff]
          %v968 = vld [vmem:[#allocation9 + $0x38] sm:$0xf]
          %v969 = vld [vmem:[#allocation9 + $0x3c] sm:$0xff]
          %v970 = vld [vmem:[#allocation9 + $0x44] sm:$0xf]
          %v971 = vld [vmem:[#allocation9 + $0x48] sm:$0xff]
          %v972 = vld [vmem:[#allocation9 + $0x50] sm:$0xf]
          %v973 = vld [vmem:[#allocation9 + $0x54] sm:$0xff]
          %v974 = vld [vmem:[#allocation9 + $0x5c] sm:$0xf]
          %v975 = vld [vmem:[#allocation9 + $0x60] sm:$0xff]
          %v976 = vld [vmem:[#allocation9 + $0x68] sm:$0xf]
          %v977 = vld [vmem:[#allocation9 + $0x6c] sm:$0xff]
          %v978 = vld [vmem:[#allocation9 + $0x74] sm:$0xf]
          %v979 = vld [vmem:[#allocation9 + $0x78] sm:$0xff]
          %v980 = vld [vmem:[#allocation9 + $0x80] sm:$0xf]
          %v981 = vld [vmem:[#allocation9 + $0x84] sm:$0xff]
          %v982 = vld [vmem:[#allocation9 + $0x8c] sm:$0xf]
          %v983 = vld [vmem:[#allocation9 + $0x90] sm:$0xff]
          %v984 = vld [vmem:[#allocation9 + $0x98] sm:$0xf]
          %v985 = vld [vmem:[#allocation9 + $0x9c] sm:$0xff]
          %v986 = vld [vmem:[#allocation9 + $0xa4] sm:$0xf]
          %v987 = vld [vmem:[#allocation9 + $0xa8] sm:$0xff]
          %v988 = vld [vmem:[#allocation9 + $0xb0] sm:$0xf]
          %v989 = vld [vmem:[#allocation9 + $0xb4] sm:$0xff]
          %v990 = vld [vmem:[#allocation9 + $0xbc] sm:$0xf]
          %v991 = vld [vmem:[#allocation9 + $0xc0] sm:$0xff]
          %v992 = vld [vmem:[#allocation9 + $0xc8] sm:$0xf]
          %v993 = vld [vmem:[#allocation9 + $0xcc] sm:$0xff]
          %v994 = vld [vmem:[#allocation9 + $0xd4] sm:$0xf]
          %v995 = vld [vmem:[#allocation9 + $0xd8] sm:$0xff]
          %v996 = vld [vmem:[#allocation9 + $0xe0] sm:$0xf]
          %v997 = vld [vmem:[#allocation9 + $0xe4] sm:$0xff]
          %v998 = vld [vmem:[#allocation9 + $0xec] sm:$0xf]
          %v999 = vld [vmem:[#allocation9 + $0xf0] sm:$0xff]
          %v1000 = vld [vmem:[#allocation9 + $0xf8] sm:$0xf]
          %v1001 = vld [vmem:[#allocation9 + $0xfc] sm:$0xff]
          %v1002 = vld [vmem:[#allocation9 + $0x104] sm:$0xf]
          %v1003 = vld [vmem:[#allocation9 + $0x108] sm:$0xff]
          %v1004 = vld [vmem:[#allocation9 + $0x110] sm:$0xf]
          %v1005 = vld [vmem:[#allocation9 + $0x114] sm:$0xff]
          %v1006 = vld [vmem:[#allocation9 + $0x11c] sm:$0xf]
          %v1007 = vld [vmem:[#allocation9 + $0x120] sm:$0xff]
          %v1008 = vld [vmem:[#allocation9 + $0x128] sm:$0xf]
          %v1009 = vld [vmem:[#allocation9 + $0x12c] sm:$0xff]
          %v1010 = vld [vmem:[#allocation9 + $0x134] sm:$0xf]
          %v1011 = vld [vmem:[#allocation9 + $0x138] sm:$0xff]
          %v1012 = vld [vmem:[#allocation9 + $0x140] sm:$0xf]
          %v1013 = vld [vmem:[#allocation9 + $0x144] sm:$0xff]
          %v1014 = vld [vmem:[#allocation9 + $0x14c] sm:$0xf]
          %v1015 = vld [vmem:[#allocation9 + $0x150] sm:$0xff]
          %v1016 = vld [vmem:[#allocation9 + $0x158] sm:$0xf]
          %v1017 = vld [vmem:[#allocation9 + $0x15c] sm:$0xff]
          %v1018 = vld [vmem:[#allocation9 + $0x164] sm:$0xf]
          %v1019 = vld [vmem:[#allocation9 + $0x168] sm:$0xff]
          %v1020 = vld [vmem:[#allocation9 + $0x170] sm:$0xf]
          %v1021 = vld [vmem:[#allocation9 + $0x174] sm:$0xff]
          %v1022 = vld [vmem:[#allocation9 + $0x17c] sm:$0xf]
          %v1023 = vld [vmem:[#allocation9 + $0x180] sm:$0xff]
          %v1024 = vld [vmem:[#allocation9 + $0x188] sm:$0xf]
          %v1025 = vld [vmem:[#allocation9 + $0x18c] sm:$0xff]
          %v1026 = vld [vmem:[#allocation9 + $0x194] sm:$0xf]
          %v1027 = vld [vmem:[#allocation9 + $0x198] sm:$0xff]
          %v1028 = vld [vmem:[#allocation9 + $0x1a0] sm:$0xf]
          %v1029 = vld [vmem:[#allocation9 + $0x1a4] sm:$0xff]
          %v1030 = vld [vmem:[#allocation9 + $0x1ac] sm:$0xf]
          %v1031 = vld [vmem:[#allocation9 + $0x1b0] sm:$0xff]
          %v1032 = vld [vmem:[#allocation9 + $0x1b8] sm:$0xf]
          %v1033 = vld [vmem:[#allocation9 + $0x1bc] sm:$0xff]
          %v1034 = vld [vmem:[#allocation9 + $0x1c4] sm:$0xf]
          %v1035 = vld [vmem:[#allocation9 + $0x1c8] sm:$0xff]
          %v1036 = vld [vmem:[#allocation9 + $0x1d0] sm:$0xf]
          %v1037 = vld [vmem:[#allocation9 + $0x1d4] sm:$0xff]
          %v1038 = vld [vmem:[#allocation9 + $0x1dc] sm:$0xf]
          %v1039 = vld [vmem:[#allocation9 + $0x1e0] sm:$0xff]
          %v1040 = vld [vmem:[#allocation9 + $0x1e8] sm:$0xf]
          %v1041 = vld [vmem:[#allocation9 + $0x1ec] sm:$0xff]
          %v1042 = vld [vmem:[#allocation9 + $0x1f4] sm:$0xf]
          %v1043 = vld [vmem:[#allocation9 + $0x1f8] sm:$0xff]
          %v1044 = vld [vmem:[#allocation9 + $0x200] sm:$0xf]
          %v1045 = vld [vmem:[#allocation9 + $0x204] sm:$0xff]
          %v1046 = vld [vmem:[#allocation9 + $0x20c] sm:$0xf]
          %v1047 = vld [vmem:[#allocation9 + $0x210] sm:$0xff]
          %v1048 = vld [vmem:[#allocation9 + $0x218] sm:$0xf]
          %v1049 = vld [vmem:[#allocation9 + $0x21c] sm:$0xff]
          %v1050 = vld [vmem:[#allocation9 + $0x224] sm:$0xf]
          %v1051 = vld [vmem:[#allocation9 + $0x228] sm:$0xff]
          %v1052 = vld [vmem:[#allocation9 + $0x230] sm:$0xf]
          %v1053 = vld [vmem:[#allocation9 + $0x234] sm:$0xff]
          %v1054 = vld [vmem:[#allocation9 + $0x23c] sm:$0xf]
          %v1055 = vld [vmem:[#allocation11] sm:$0x7]
          %v1057 = vlaneseq
          %v1058 = vshrl.u32 %v1057, 7
          %v1059 = vsub.s32 0, %v1058
          %v1060 = vrot.slane %v1055, %v1059
          %v1061 = vlaneseq
          %v1062 = vshrl.u32 %v1061, 7
          %v1063 = vsub.s32 1, %v1062
          %v1064 = vrot.slane %v1055, %v1063
          %v1065 = vlaneseq
          %v1066 = vshrl.u32 %v1065, 7
          %v1067 = vsub.s32 2, %v1066
          %v1068 = vrot.slane %v1055, %v1067
          %v1168 = vunpack.c.l.b16 %v959
          %v1169 = vunpack.c.h.b16 %v959
          %v1170 = vunpack.c.l.b16 %v960
          %v1171 = vunpack.c.l.b16 %v961
          %v1172 = vunpack.c.h.b16 %v961
          %v1173 = vunpack.c.l.b16 %v962
          %v1174 = vunpack.c.l.b16 %v963
          %v1175 = vunpack.c.h.b16 %v963
          %v1176 = vunpack.c.l.b16 %v964
          %v1177 = vunpack.c.l.b16 %v965
          %v1178 = vunpack.c.h.b16 %v965
          %v1179 = vunpack.c.l.b16 %v966
          %v1180 = vunpack.c.l.b16 %v967
          %v1181 = vunpack.c.h.b16 %v967
          %v1182 = vunpack.c.l.b16 %v968
          %v1183 = vunpack.c.l.b16 %v969
          %v1184 = vunpack.c.h.b16 %v969
          %v1185 = vunpack.c.l.b16 %v970
          %v1186 = vunpack.c.l.b16 %v971
          %v1187 = vunpack.c.h.b16 %v971
          %v1188 = vunpack.c.l.b16 %v972
          %v1189 = vunpack.c.l.b16 %v973
          %v1190 = vunpack.c.h.b16 %v973
          %v1191 = vunpack.c.l.b16 %v974
          %v1192 = vunpack.c.l.b16 %v975
          %v1193 = vunpack.c.h.b16 %v975
          %v1194 = vunpack.c.l.b16 %v976
          %v1195 = vunpack.c.l.b16 %v977
          %v1196 = vunpack.c.h.b16 %v977
          %v1197 = vunpack.c.l.b16 %v978
          %v1198 = vunpack.c.l.b16 %v979
          %v1199 = vunpack.c.h.b16 %v979
          %v1200 = vunpack.c.l.b16 %v980
          %v1201 = vunpack.c.l.b16 %v981
          %v1202 = vunpack.c.h.b16 %v981
          %v1203 = vunpack.c.l.b16 %v982
          %v1204 = vunpack.c.l.b16 %v983
          %v1205 = vunpack.c.h.b16 %v983
          %v1206 = vunpack.c.l.b16 %v984
          %v1207 = vunpack.c.l.b16 %v985
          %v1208 = vunpack.c.h.b16 %v985
          %v1209 = vunpack.c.l.b16 %v986
          %v1210 = vunpack.c.l.b16 %v987
          %v1211 = vunpack.c.h.b16 %v987
          %v1212 = vunpack.c.l.b16 %v988
          %v1213 = vunpack.c.l.b16 %v989
          %v1214 = vunpack.c.h.b16 %v989
          %v1215 = vunpack.c.l.b16 %v990
          %v1216 = vunpack.c.l.b16 %v991
          %v1217 = vunpack.c.h.b16 %v991
          %v1218 = vunpack.c.l.b16 %v992
          %v1219 = vunpack.c.l.b16 %v993
          %v1220 = vunpack.c.h.b16 %v993
          %v1221 = vunpack.c.l.b16 %v994
          %v1222 = vunpack.c.l.b16 %v995
          %v1223 = vunpack.c.h.b16 %v995
          %v1224 = vunpack.c.l.b16 %v996
          %v1225 = vunpack.c.l.b16 %v997
          %v1226 = vunpack.c.h.b16 %v997
          %v1227 = vunpack.c.l.b16 %v998
          %v1228 = vunpack.c.l.b16 %v999
          %v1229 = vunpack.c.h.b16 %v999
          %v1230 = vunpack.c.l.b16 %v1000
          %v1231 = vunpack.c.l.b16 %v1001
          %v1232 = vunpack.c.h.b16 %v1001
          %v1233 = vunpack.c.l.b16 %v1002
          %v1234 = vunpack.c.l.b16 %v1003
          %v1235 = vunpack.c.h.b16 %v1003
          %v1236 = vunpack.c.l.b16 %v1004
          %v1237 = vunpack.c.l.b16 %v1005
          %v1238 = vunpack.c.h.b16 %v1005
          %v1239 = vunpack.c.l.b16 %v1006
          %v1240 = vunpack.c.l.b16 %v1007
          %v1241 = vunpack.c.h.b16 %v1007
          %v1242 = vunpack.c.l.b16 %v1008
          %v1243 = vunpack.c.l.b16 %v1009
          %v1244 = vunpack.c.h.b16 %v1009
          %v1245 = vunpack.c.l.b16 %v1010
          %v1246 = vunpack.c.l.b16 %v1011
          %v1247 = vunpack.c.h.b16 %v1011
          %v1248 = vunpack.c.l.b16 %v1012
          %v1249 = vunpack.c.l.b16 %v1013
          %v1250 = vunpack.c.h.b16 %v1013
          %v1251 = vunpack.c.l.b16 %v1014
          %v1252 = vunpack.c.l.b16 %v1015
          %v1253 = vunpack.c.h.b16 %v1015
          %v1254 = vunpack.c.l.b16 %v1016
          %v1255 = vunpack.c.l.b16 %v1017
          %v1256 = vunpack.c.h.b16 %v1017
          %v1257 = vunpack.c.l.b16 %v1018
          %v1258 = vunpack.c.l.b16 %v1019
          %v1259 = vunpack.c.h.b16 %v1019
          %v1260 = vunpack.c.l.b16 %v1020
          %v1261 = vunpack.c.l.b16 %v1021
          %v1262 = vunpack.c.h.b16 %v1021
          %v1263 = vunpack.c.l.b16 %v1022
          %v1264 = vunpack.c.l.b16 %v1023
          %v1265 = vunpack.c.h.b16 %v1023
          %v1266 = vunpack.c.l.b16 %v1024
          %v1267 = vunpack.c.l.b16 %v1025
          %v1268 = vunpack.c.h.b16 %v1025
          %v1269 = vunpack.c.l.b16 %v1026
          %v1270 = vunpack.c.l.b16 %v1027
          %v1271 = vunpack.c.h.b16 %v1027
          %v1272 = vunpack.c.l.b16 %v1028
          %v1273 = vunpack.c.l.b16 %v1029
          %v1274 = vunpack.c.h.b16 %v1029
          %v1275 = vunpack.c.l.b16 %v1030
          %v1276 = vunpack.c.l.b16 %v1031
          %v1277 = vunpack.c.h.b16 %v1031
          %v1278 = vunpack.c.l.b16 %v1032
          %v1279 = vunpack.c.l.b16 %v1033
          %v1280 = vunpack.c.h.b16 %v1033
          %v1281 = vunpack.c.l.b16 %v1034
          %v1282 = vunpack.c.l.b16 %v1035
          %v1283 = vunpack.c.h.b16 %v1035
          %v1284 = vunpack.c.l.b16 %v1036
          %v1285 = vunpack.c.l.b16 %v1037
          %v1286 = vunpack.c.h.b16 %v1037
          %v1287 = vunpack.c.l.b16 %v1038
          %v1288 = vunpack.c.l.b16 %v1039
          %v1289 = vunpack.c.h.b16 %v1039
          %v1290 = vunpack.c.l.b16 %v1040
          %v1291 = vunpack.c.l.b16 %v1041
          %v1292 = vunpack.c.h.b16 %v1041
          %v1293 = vunpack.c.l.b16 %v1042
          %v1294 = vunpack.c.l.b16 %v1043
          %v1295 = vunpack.c.h.b16 %v1043
          %v1296 = vunpack.c.l.b16 %v1044
          %v1297 = vunpack.c.l.b16 %v1045
          %v1298 = vunpack.c.h.b16 %v1045
          %v1299 = vunpack.c.l.b16 %v1046
          %v1300 = vunpack.c.l.b16 %v1047
          %v1301 = vunpack.c.h.b16 %v1047
          %v1302 = vunpack.c.l.b16 %v1048
          %v1303 = vunpack.c.l.b16 %v1049
          %v1304 = vunpack.c.h.b16 %v1049
          %v1305 = vunpack.c.l.b16 %v1050
          %v1306 = vunpack.c.l.b16 %v1051
          %v1307 = vunpack.c.h.b16 %v1051
          %v1308 = vunpack.c.l.b16 %v1052
          %v1309 = vunpack.c.l.b16 %v1053
          %v1310 = vunpack.c.h.b16 %v1053
          %v1311 = vunpack.c.l.b16 %v1054
          %v1312 = vpack.c.b16 %v1171, %v1168
          %v1313 = vpack.c.b16 %v1172, %v1169
          %v1314 = vpack.c.b16 %v1173, %v1170
          %v1315 = vpack.c.b16 %v1177, %v1174
          %v1316 = vpack.c.b16 %v1178, %v1175
          %v1317 = vpack.c.b16 %v1179, %v1176
          %v1318 = vpack.c.b16 %v1183, %v1180
          %v1319 = vpack.c.b16 %v1184, %v1181
          %v1320 = vpack.c.b16 %v1185, %v1182
          %v1321 = vpack.c.b16 %v1189, %v1186
          %v1322 = vpack.c.b16 %v1190, %v1187
          %v1323 = vpack.c.b16 %v1191, %v1188
          %v1324 = vpack.c.b16 %v1195, %v1192
          %v1325 = vpack.c.b16 %v1196, %v1193
          %v1326 = vpack.c.b16 %v1197, %v1194
          %v1327 = vpack.c.b16 %v1201, %v1198
          %v1328 = vpack.c.b16 %v1202, %v1199
          %v1329 = vpack.c.b16 %v1203, %v1200
          %v1330 = vpack.c.b16 %v1207, %v1204
          %v1331 = vpack.c.b16 %v1208, %v1205
          %v1332 = vpack.c.b16 %v1209, %v1206
          %v1333 = vpack.c.b16 %v1213, %v1210
          %v1334 = vpack.c.b16 %v1214, %v1211
          %v1335 = vpack.c.b16 %v1215, %v1212
          %v1336 = vpack.c.b16 %v1219, %v1216
          %v1337 = vpack.c.b16 %v1220, %v1217
          %v1338 = vpack.c.b16 %v1221, %v1218
          %v1339 = vpack.c.b16 %v1225, %v1222
          %v1340 = vpack.c.b16 %v1226, %v1223
          %v1341 = vpack.c.b16 %v1227, %v1224
          %v1342 = vpack.c.b16 %v1231, %v1228
          %v1343 = vpack.c.b16 %v1232, %v1229
          %v1344 = vpack.c.b16 %v1233, %v1230
          %v1345 = vpack.c.b16 %v1237, %v1234
          %v1346 = vpack.c.b16 %v1238, %v1235
          %v1347 = vpack.c.b16 %v1239, %v1236
          %v1348 = vpack.c.b16 %v1243, %v1240
          %v1349 = vpack.c.b16 %v1244, %v1241
          %v1350 = vpack.c.b16 %v1245, %v1242
          %v1351 = vpack.c.b16 %v1249, %v1246
          %v1352 = vpack.c.b16 %v1250, %v1247
          %v1353 = vpack.c.b16 %v1251, %v1248
          %v1354 = vpack.c.b16 %v1255, %v1252
          %v1355 = vpack.c.b16 %v1256, %v1253
          %v1356 = vpack.c.b16 %v1257, %v1254
          %v1357 = vpack.c.b16 %v1261, %v1258
          %v1358 = vpack.c.b16 %v1262, %v1259
          %v1359 = vpack.c.b16 %v1263, %v1260
          %v1360 = vpack.c.b16 %v1267, %v1264
          %v1361 = vpack.c.b16 %v1268, %v1265
          %v1362 = vpack.c.b16 %v1269, %v1266
          %v1363 = vpack.c.b16 %v1273, %v1270
          %v1364 = vpack.c.b16 %v1274, %v1271
          %v1365 = vpack.c.b16 %v1275, %v1272
          %v1366 = vpack.c.b16 %v1279, %v1276
          %v1367 = vpack.c.b16 %v1280, %v1277
          %v1368 = vpack.c.b16 %v1281, %v1278
          %v1369 = vpack.c.b16 %v1285, %v1282
          %v1370 = vpack.c.b16 %v1286, %v1283
          %v1371 = vpack.c.b16 %v1287, %v1284
          %v1372 = vpack.c.b16 %v1291, %v1288
          %v1373 = vpack.c.b16 %v1292, %v1289
          %v1374 = vpack.c.b16 %v1293, %v1290
          %v1375 = vpack.c.b16 %v1297, %v1294
          %v1376 = vpack.c.b16 %v1298, %v1295
          %v1377 = vpack.c.b16 %v1299, %v1296
          %v1378 = vpack.c.b16 %v1303, %v1300
          %v1379 = vpack.c.b16 %v1304, %v1301
          %v1380 = vpack.c.b16 %v1305, %v1302
          %v1381 = vpack.c.b16 %v1309, %v1306
          %v1382 = vpack.c.b16 %v1310, %v1307
          %v1383 = vpack.c.b16 %v1311, %v1308
          %1456 = vmatprep.subr.bf16.mxu0 %v1313
          %1457 = vmatpush1.bf16.msra.mxu0 %v1312
          %1458 = vmatprep.subr.bf16.mxu0 %v1316
          %1459 = vmatpush1.bf16.msra.mxu0 %v1315
          %1460 = vmatprep.subr.bf16.mxu0 %v1319
          %1461 = vmatpush1.bf16.msra.mxu0 %v1318
          %1462 = vmatprep.subr.bf16.mxu0 %v1322
          %1463 = vmatpush1.bf16.msra.mxu0 %v1321
          %1464 = vmatprep.subr.bf16.mxu0 %v1325
          %1465 = vmatpush1.bf16.msra.mxu0 %v1324
          %1466 = vmatprep.subr.bf16.mxu0 %v1328
          %1467 = vmatpush1.bf16.msra.mxu0 %v1327
          %1468 = vmatprep.subr.bf16.mxu0 %v1331
          %1469 = vmatpush1.bf16.msra.mxu0 %v1330
          %1470 = vmatprep.subr.bf16.mxu0 %v1334
          %1471 = vmatpush1.bf16.msra.mxu0 %v1333
          %1472 = vmatprep.subr.bf16.mxu0 %v1337
          %1473 = vmatpush1.bf16.msra.mxu0 %v1336
          %1474 = vmatprep.subr.bf16.mxu0 %v1340
          %1475 = vmatpush1.bf16.msra.mxu0 %v1339
          %1476 = vmatprep.subr.bf16.mxu0 %v1343
          %1477 = vmatpush1.bf16.msra.mxu0 %v1342
          %1478 = vmatprep.subr.bf16.mxu0 %v1346
          %1479 = vmatpush1.bf16.msra.mxu0 %v1345
          %1480 = vmatprep.subr.bf16.mxu0 %v1349
          %1481 = vmatpush1.bf16.msra.mxu0 %v1348
          %1482 = vmatprep.subr.bf16.mxu0 %v1352
          %1483 = vmatpush1.bf16.msra.mxu0 %v1351
          %1484 = vmatprep.subr.bf16.mxu0 %v1355
          %1485 = vmatpush1.bf16.msra.mxu0 %v1354
          %1486 = vmatprep.subr.bf16.mxu0 %v1358
          %1487 = vmatpush1.bf16.msra.mxu0 %v1357
          %1488 = vmatprep.mubr.bf16.mxu0 %v957
          %1489 = vmatmul.mubr.bf16.gmra.mrb[0].mxu0 %v956
          %v1490 = vpop.f32.mrb[0].mxu0
          %v1491 = vadd.f32 %v1060, %v1490
          %v1492 = vpop.f32.mrb[0].mxu0
          %v1493 = vadd.f32 %v1064, %v1492
          %v1494 = vpop.f32.mrb[0].mxu0
          %v1495 = vpop.f32.mrb[0].mxu0
          %1496 = vdwg.mxu0
          %1497 = vmatprep.subr.bf16.mxu0 %v1361
          %1498 = vmatpush1.bf16.msra.mxu0 %v1360
          %1499 = vmatprep.subr.bf16.mxu0 %v1364
          %1500 = vmatpush1.bf16.msra.mxu0 %v1363
          %1501 = vmatprep.subr.bf16.mxu0 %v1367
          %1502 = vmatpush1.bf16.msra.mxu0 %v1366
          %1503 = vmatprep.subr.bf16.mxu0 %v1370
          %1504 = vmatpush1.bf16.msra.mxu0 %v1369
          %1505 = vmatprep.subr.bf16.mxu0 %v1373
          %1506 = vmatpush1.bf16.msra.mxu0 %v1372
          %1507 = vmatprep.subr.bf16.mxu0 %v1376
          %1508 = vmatpush1.bf16.msra.mxu0 %v1375
          %1509 = vmatprep.subr.bf16.mxu0 %v1379
          %1510 = vmatpush1.bf16.msra.mxu0 %v1378
          %1511 = vmatprep.subr.bf16.mxu0 %v1382
          %1512 = vmatpush1.bf16.msra.mxu0 %v1381
          %1513 = vmatprep.subr.bf16.mxu0 0
          %1514 = vmatpush1.bf16.msra.mxu0 0
          %1515 = vmatprep.subr.bf16.mxu0 0
          %1516 = vmatpush1.bf16.msra.mxu0 0
          %1517 = vmatprep.subr.bf16.mxu0 0
          %1518 = vmatpush1.bf16.msra.mxu0 0
          %1519 = vmatprep.subr.bf16.mxu0 0
          %1520 = vmatpush1.bf16.msra.mxu0 0
          %1521 = vmatprep.subr.bf16.mxu0 0
          %1522 = vmatpush1.bf16.msra.mxu0 0
          %1523 = vmatprep.subr.bf16.mxu0 0
          %1524 = vmatpush1.bf16.msra.mxu0 0
          %1525 = vmatprep.subr.bf16.mxu0 0
          %1526 = vmatpush1.bf16.msra.mxu0 0
          %1527 = vmatprep.subr.bf16.mxu0 0
          %1528 = vmatpush1.bf16.msra.mxu0 0
          %1529 = vmatprep.mubr.bf16.mxu0 0
          %1530 = vmatmul.mubr.bf16.gmra.mrb[0].mxu0 %v958
          %v1531 = vpop.f32.mrb[0].mxu0
          %v1532 = vadd.f32 %v1491, %v1531
          %v1533 = vpop.f32.mrb[0].mxu0
          %v1534 = vadd.f32 %v1493, %v1533
          %v1535 = vpop.f32.mrb[0].mxu0
          %v1536 = vpop.f32.mrb[0].mxu0
          %1537 = vdwg.mxu0
          %1538 = vmatprep.subr.bf16.mxu0 0
          %1539 = vmatpush1.bf16.msra.mxu0 %v1314
          %1540 = vmatprep.subr.bf16.mxu0 0
          %1541 = vmatpush1.bf16.msra.mxu0 %v1317
          %1542 = vmatprep.subr.bf16.mxu0 0
          %1543 = vmatpush1.bf16.msra.mxu0 %v1320
          %1544 = vmatprep.subr.bf16.mxu0 0
          %1545 = vmatpush1.bf16.msra.mxu0 %v1323
          %1546 = vmatprep.subr.bf16.mxu0 0
          %1547 = vmatpush1.bf16.msra.mxu0 %v1326
          %1548 = vmatprep.subr.bf16.mxu0 0
          %1549 = vmatpush1.bf16.msra.mxu0 %v1329
          %1550 = vmatprep.subr.bf16.mxu0 0
          %1551 = vmatpush1.bf16.msra.mxu0 %v1332
          %1552 = vmatprep.subr.bf16.mxu0 0
          %1553 = vmatpush1.bf16.msra.mxu0 %v1335
          %1554 = vmatprep.subr.bf16.mxu0 0
          %1555 = vmatpush1.bf16.msra.mxu0 %v1338
          %1556 = vmatprep.subr.bf16.mxu0 0
          %1557 = vmatpush1.bf16.msra.mxu0 %v1341
          %1558 = vmatprep.subr.bf16.mxu0 0
          %1559 = vmatpush1.bf16.msra.mxu0 %v1344
          %1560 = vmatprep.subr.bf16.mxu0 0
          %1561 = vmatpush1.bf16.msra.mxu0 %v1347
          %1562 = vmatprep.subr.bf16.mxu0 0
          %1563 = vmatpush1.bf16.msra.mxu0 %v1350
          %1564 = vmatprep.subr.bf16.mxu0 0
          %1565 = vmatpush1.bf16.msra.mxu0 %v1353
          %1566 = vmatprep.subr.bf16.mxu0 0
          %1567 = vmatpush1.bf16.msra.mxu0 %v1356
          %1568 = vmatprep.subr.bf16.mxu0 0
          %1569 = vmatpush1.bf16.msra.mxu0 %v1359
          %1570 = vmatprep.mubr.bf16.mxu0 %v957
          %1571 = vmatmul.mubr.bf16.gmra.mrb[0].mxu0 %v956
          %v1572 = vpop.f32.mrb[0].mxu0
          %v1573 = vadd.f32 %v1068, %v1572
          %v1574 = vpop.f32.mrb[0].mxu0
          %v1575 = vpop.f32.mrb[0].mxu0
          %v1576 = vpop.f32.mrb[0].mxu0
          %1577 = vdwg.mxu0
          %1578 = vmatprep.subr.bf16.mxu0 0
          %1579 = vmatpush1.bf16.msra.mxu0 %v1362
          %1580 = vmatprep.subr.bf16.mxu0 0
          %1581 = vmatpush1.bf16.msra.mxu0 %v1365
          %1582 = vmatprep.subr.bf16.mxu0 0
          %1583 = vmatpush1.bf16.msra.mxu0 %v1368
          %1584 = vmatprep.subr.bf16.mxu0 0
          %1585 = vmatpush1.bf16.msra.mxu0 %v1371
          %1586 = vmatprep.subr.bf16.mxu0 0
          %1587 = vmatpush1.bf16.msra.mxu0 %v1374
          %1588 = vmatprep.subr.bf16.mxu0 0
          %1589 = vmatpush1.bf16.msra.mxu0 %v1377
          %1590 = vmatprep.subr.bf16.mxu0 0
          %1591 = vmatpush1.bf16.msra.mxu0 %v1380
          %1592 = vmatprep.subr.bf16.mxu0 0
          %1593 = vmatpush1.bf16.msra.mxu0 %v1383
          %1594 = vmatprep.subr.bf16.mxu0 0
          %1595 = vmatpush1.bf16.msra.mxu0 0
          %1596 = vmatprep.subr.bf16.mxu0 0
          %1597 = vmatpush1.bf16.msra.mxu0 0
          %1598 = vmatprep.subr.bf16.mxu0 0
          %1599 = vmatpush1.bf16.msra.mxu0 0
          %1600 = vmatprep.subr.bf16.mxu0 0
          %1601 = vmatpush1.bf16.msra.mxu0 0
          %1602 = vmatprep.subr.bf16.mxu0 0
          %1603 = vmatpush1.bf16.msra.mxu0 0
          %1604 = vmatprep.subr.bf16.mxu0 0
          %1605 = vmatpush1.bf16.msra.mxu0 0
          %1606 = vmatprep.subr.bf16.mxu0 0
          %1607 = vmatpush1.bf16.msra.mxu0 0
          %1608 = vmatprep.subr.bf16.mxu0 0
          %1609 = vmatpush1.bf16.msra.mxu0 0
          %1610 = vmatprep.mubr.bf16.mxu0 0
          %1611 = vmatmul.mubr.bf16.gmra.mrb[0].mxu0 %v958
          %v1612 = vpop.f32.mrb[0].mxu0
          %v1613 = vadd.f32 %v1573, %v1612
          %v1614 = vpop.f32.mrb[0].mxu0
          %v1615 = vpop.f32.mrb[0].mxu0
          %v1616 = vpop.f32.mrb[0].mxu0
          %1617 = vdwg.mxu0
          %v1620 = vcombine.low %v1532, %v1534
          %1622 = vst [vmem:[#allocation16] sm:$0xff] %v1620
          %1623 = vst [vmem:[#allocation16 + $0x8] sm:$0xf] %v1613
          %v1624 = vxor.u32 %v1532, 2147483648
          %v1625 = vxor.u32 %v1534, 2147483648
          %v1626 = vxor.u32 %v1613, 2147483648
          %v1627 = vmul.f32 %v1624, 1.442695
          %v1628 = vpow.pop %v1627
          %v1629 = vmul.f32 %v1625, 1.442695
          %v1630 = vpow.pop %v1629
          %v1631 = vmul.f32 %v1626, 1.442695
          %v1632 = vpow.pop %v1631
          %v1633 = vadd.f32 %v1628, 1.0
          %v1634 = vadd.f32 %v1630, 1.0
          %v1635 = vadd.f32 %v1632, 1.0
          %v1636 = vrcp.pop %v1633
          %v1637 = vmul.f32 1.0, %v1636
          %v1638 = vrcp.pop %v1634
          %v1639 = vmul.f32 1.0, %v1638
          %v1640 = vrcp.pop %v1635
          %v1641 = vmul.f32 1.0, %v1640
          %v1642 = vmul.f32 %v1532, %v1637
          %v1643 = vmul.f32 %v1534, %v1639
          %v1644 = vmul.f32 %v1613, %v1641
          %v1645 = vpack.c.bf16 %v1642, %v1642
          %v1646 = vpack.c.bf16 %v1643, %v1643
          %v1647 = vpack.c.bf16 %v1644, %v1644
          %v1651 = vcombine.low %v1645, %v1646
          %v1653 = vunpack.c.l.s4 1983009808
          %v1654 = vunpack.c.0.s8 %v1653
          %v1655 = vlaneseq
          %v1656 = vshrl.u32 %v1655, 7
          %v1657 = vsub.s32 %v1654, %v1656
          %v1658 = vrot.slane %v1651, %v1657
          %v1660 = vunpack.c.l.s4 1983009808
          %v1661 = vunpack.c.0.s8 %v1660
          %v1662 = vlaneseq
          %v1663 = vshrl.u32 %v1662, 7
          %v1664 = vsub.s32 %v1661, %v1663
          %v1665 = vrot.slane %v1647, %v1664
          %v1666 = vcombine.low %v1658, %v1665
          %1668 = vst [vmem:[#allocation2] sm:$0x3f] %v1666
        $region84: #{ada_layer_norm_single.1} parent=51 // pred_fallthru
          _
        %v1669 = vld [vmem:[#allocation2] sm:$0x3f]
        %v1670 = vld [vmem:[%s403] sm:$0xff]
        %v1671 = vld [vmem:[%s403 + $0x8] sm:$0xff]
        %v1672 = vld [vmem:[%s403 + $0x10] sm:$0xff]
        %v1673 = vld [vmem:[%s403 + $0x18] sm:$0xff]
        %v1674 = vld [vmem:[%s403 + $0x20] sm:$0xff]
        %v1675 = vld [vmem:[%s403 + $0x28] sm:$0xff]
        %v1676 = vld [vmem:[%s403 + $0x30] sm:$0xff]
        %v1677 = vld [vmem:[%s403 + $0x38] sm:$0xff]
        %v1678 = vld [vmem:[%s403 + $0x40] sm:$0xff]
        %v1679 = vld [vmem:[%s403 + $0x48] sm:$0xff]
        %v1680 = vld [vmem:[%s403 + $0x50] sm:$0xff]
        %v1681 = vld [vmem:[%s403 + $0x58] sm:$0xff]
        %v1682 = vld [vmem:[%s403 + $0x60] sm:$0xff]
        %v1683 = vld [vmem:[%s403 + $0x68] sm:$0xff]
        %v1684 = vld [vmem:[%s403 + $0x70] sm:$0xff]
        %v1685 = vld [vmem:[%s403 + $0x78] sm:$0xff]
        %v1686 = vld [vmem:[%s403 + $0x80] sm:$0xff]
        %v1687 = vld [vmem:[%s403 + $0x88] sm:$0xff]
        %v1688 = vld [vmem:[%s403 + $0x90] sm:$0xff]
        %v1689 = vld [vmem:[%s403 + $0x98] sm:$0xff]
        %v1690 = vld [vmem:[%s403 + $0xa0] sm:$0xff]
        %v1691 = vld [vmem:[%s403 + $0xa8] sm:$0xff]
        %v1692 = vld [vmem:[%s403 + $0xb0] sm:$0xff]
        %v1693 = vld [vmem:[%s403 + $0xb8] sm:$0xff]
        %v1694 = vld [vmem:[%s403 + $0xc0] sm:$0xff]
        %v1695 = vld [vmem:[%s403 + $0xc8] sm:$0xff]
        %v1696 = vld [vmem:[%s403 + $0xd0] sm:$0xff]
        %v1697 = vld [vmem:[%s403 + $0xd8] sm:$0xff]
        %v1698 = vld [vmem:[%s403 + $0xe0] sm:$0xff]
        %v1699 = vld [vmem:[%s403 + $0xe8] sm:$0xff]
        %v1700 = vld [vmem:[%s403 + $0xf0] sm:$0xff]
        %v1701 = vld [vmem:[%s403 + $0xf8] sm:$0xff]
        %v1702 = vld [vmem:[%s403 + $0x100] sm:$0xff]
        %v1703 = vld [vmem:[%s403 + $0x108] sm:$0xff]
        %v1704 = vld [vmem:[%s403 + $0x110] sm:$0xff]
        %v1705 = vld [vmem:[%s403 + $0x118] sm:$0xff]
        %v1706 = vld [vmem:[%s403 + $0x120] sm:$0xff]
        %v1707 = vld [vmem:[%s403 + $0x128] sm:$0xff]
        %v1708 = vld [vmem:[%s403 + $0x130] sm:$0xff]
        %v1709 = vld [vmem:[%s403 + $0x138] sm:$0xff]
        %v1710 = vld [vmem:[%s403 + $0x140] sm:$0xff]
        %v1711 = vld [vmem:[%s403 + $0x148] sm:$0xff]
        %v1712 = vld [vmem:[%s403 + $0x150] sm:$0xff]
        %v1713 = vld [vmem:[%s403 + $0x158] sm:$0xff]
        %v1714 = vld [vmem:[%s403 + $0x160] sm:$0xff]
        %v1715 = vld [vmem:[%s403 + $0x168] sm:$0xff]
        %v1716 = vld [vmem:[%s403 + $0x170] sm:$0xff]
        %v1717 = vld [vmem:[%s403 + $0x178] sm:$0xff]
        %v1718 = vld [vmem:[%s403 + $0x180] sm:$0xff]
        %v1719 = vld [vmem:[%s403 + $0x188] sm:$0xff]
        %v1720 = vld [vmem:[%s403 + $0x190] sm:$0xff]
        %v1721 = vld [vmem:[%s403 + $0x198] sm:$0xff]
        %v1722 = vld [vmem:[%s403 + $0x1a0] sm:$0xff]
        %v1723 = vld [vmem:[%s403 + $0x1a8] sm:$0xff]
        %v1724 = vld [vmem:[%s403 + $0x1b0] sm:$0xff]
        %v1725 = vld [vmem:[%s403 + $0x1b8] sm:$0xff]
        %v1726 = vld [vmem:[%s403 + $0x1c0] sm:$0xff]
        %v1727 = vld [vmem:[%s403 + $0x1c8] sm:$0xff]
        %v1728 = vld [vmem:[%s403 + $0x1d0] sm:$0xff]
        %v1729 = vld [vmem:[%s403 + $0x1d8] sm:$0xff]
        %v1730 = vld [vmem:[%s403 + $0x1e0] sm:$0xff]
        %v1731 = vld [vmem:[%s403 + $0x1e8] sm:$0xff]
        %v1732 = vld [vmem:[%s403 + $0x1f0] sm:$0xff]
        %v1733 = vld [vmem:[%s403 + $0x1f8] sm:$0xff]
        %v1734 = vld [vmem:[%s403 + $0x200] sm:$0xff]
        %v1735 = vld [vmem:[%s403 + $0x208] sm:$0xff]
        %v1736 = vld [vmem:[%s403 + $0x210] sm:$0xff]
        %v1737 = vld [vmem:[%s403 + $0x218] sm:$0xff]
        %v1738 = vld [vmem:[%s403 + $0x220] sm:$0xff]
        %v1739 = vld [vmem:[%s403 + $0x228] sm:$0xff]
        %v1740 = vld [vmem:[%s403 + $0x230] sm:$0xff]
        %v1741 = vld [vmem:[%s403 + $0x238] sm:$0xff]
        %v1742 = vld [vmem:[%s403 + $0x240] sm:$0xff]
        %v1743 = vld [vmem:[%s403 + $0x248] sm:$0xff]
        %v1744 = vld [vmem:[%s403 + $0x250] sm:$0xff]
        %v1745 = vld [vmem:[%s403 + $0x258] sm:$0xff]
        %v1746 = vld [vmem:[%s403 + $0x260] sm:$0xff]
        %v1747 = vld [vmem:[%s403 + $0x268] sm:$0xff]
        %v1748 = vld [vmem:[%s403 + $0x270] sm:$0xff]
        %v1749 = vld [vmem:[%s403 + $0x278] sm:$0xff]
        %v1750 = vld [vmem:[%s403 + $0x280] sm:$0xff]
        %v1751 = vld [vmem:[%s403 + $0x288] sm:$0xff]
        %v1752 = vld [vmem:[%s403 + $0x290] sm:$0xff]
        %v1753 = vld [vmem:[%s403 + $0x298] sm:$0xff]
        %v1754 = vld [vmem:[%s403 + $0x2a0] sm:$0xff]
        %v1755 = vld [vmem:[%s403 + $0x2a8] sm:$0xff]
        %v1756 = vld [vmem:[%s403 + $0x2b0] sm:$0xff]
        %v1757 = vld [vmem:[%s403 + $0x2b8] sm:$0xff]
        %v1758 = vld [vmem:[%s403 + $0x2c0] sm:$0xff]
        %v1759 = vld [vmem:[%s403 + $0x2c8] sm:$0xff]
        %v1760 = vld [vmem:[%s403 + $0x2d0] sm:$0xff]
        %v1761 = vld [vmem:[%s403 + $0x2d8] sm:$0xff]
        %v1762 = vld [vmem:[%s403 + $0x2e0] sm:$0xff]
        %v1763 = vld [vmem:[%s403 + $0x2e8] sm:$0xff]
        %v1764 = vld [vmem:[%s403 + $0x2f0] sm:$0xff]
        %v1765 = vld [vmem:[%s403 + $0x2f8] sm:$0xff]
        %v1766 = vld [vmem:[%s403 + $0x300] sm:$0xff]
        %v1767 = vld [vmem:[%s403 + $0x308] sm:$0xff]
        %v1768 = vld [vmem:[%s403 + $0x310] sm:$0xff]
        %v1769 = vld [vmem:[%s403 + $0x318] sm:$0xff]
        %v1770 = vld [vmem:[%s403 + $0x320] sm:$0xff]
        %v1771 = vld [vmem:[%s403 + $0x328] sm:$0xff]
        %v1772 = vld [vmem:[%s403 + $0x330] sm:$0xff]
        %v1773 = vld [vmem:[%s403 + $0x338] sm:$0xff]
        %v1774 = vld [vmem:[%s403 + $0x340] sm:$0xff]
        %v1775 = vld [vmem:[%s403 + $0x348] sm:$0xff]
        %v1776 = vld [vmem:[%s403 + $0x350] sm:$0xff]
        %v1777 = vld [vmem:[%s403 + $0x358] sm:$0xff]
        %v1778 = vld [vmem:[%s403 + $0x360] sm:$0xff]
        %v1779 = vld [vmem:[%s403 + $0x368] sm:$0xff]
        %v1780 = vld [vmem:[%s403 + $0x370] sm:$0xff]
        %v1781 = vld [vmem:[%s403 + $0x378] sm:$0xff]
        %v1782 = vld [vmem:[%s403 + $0x380] sm:$0xff]
        %v1783 = vld [vmem:[%s403 + $0x388] sm:$0xff]
        %v1784 = vld [vmem:[%s403 + $0x390] sm:$0xff]
        %v1785 = vld [vmem:[%s403 + $0x398] sm:$0xff]
        %v1786 = vld [vmem:[%s403 + $0x3a0] sm:$0xff]
        %v1787 = vld [vmem:[%s403 + $0x3a8] sm:$0xff]
        %v1788 = vld [vmem:[%s403 + $0x3b0] sm:$0xff]
        %v1789 = vld [vmem:[%s403 + $0x3b8] sm:$0xff]
        %v1790 = vld [vmem:[%s403 + $0x3c0] sm:$0xff]
        %v1791 = vld [vmem:[%s403 + $0x3c8] sm:$0xff]
        %v1792 = vld [vmem:[%s403 + $0x3d0] sm:$0xff]
        %v1793 = vld [vmem:[%s403 + $0x3d8] sm:$0xff]
        %v1794 = vld [vmem:[%s403 + $0x3e0] sm:$0xff]
        %v1795 = vld [vmem:[%s403 + $0x3e8] sm:$0xff]
        %v1796 = vld [vmem:[%s403 + $0x3f0] sm:$0xff]
        %v1797 = vld [vmem:[%s403 + $0x3f8] sm:$0xff]
        %v1798 = vld [vmem:[%s403 + $0x400] sm:$0xff]
        %v1799 = vld [vmem:[%s403 + $0x408] sm:$0xff]
        %v1800 = vld [vmem:[%s403 + $0x410] sm:$0xff]
        %v1801 = vld [vmem:[%s403 + $0x418] sm:$0xff]
        %v1802 = vld [vmem:[%s403 + $0x420] sm:$0xff]
        %v1803 = vld [vmem:[%s403 + $0x428] sm:$0xff]
        %v1804 = vld [vmem:[%s403 + $0x430] sm:$0xff]
        %v1805 = vld [vmem:[%s403 + $0x438] sm:$0xff]
        %v1806 = vld [vmem:[%s403 + $0x440] sm:$0xff]
        %v1807 = vld [vmem:[%s403 + $0x448] sm:$0xff]
        %v1808 = vld [vmem:[%s403 + $0x450] sm:$0xff]
        %v1809 = vld [vmem:[%s403 + $0x458] sm:$0xff]
        %v1810 = vld [vmem:[%s403 + $0x460] sm:$0xff]
        %v1811 = vld [vmem:[%s403 + $0x468] sm:$0xff]
        %v1812 = vld [vmem:[%s403 + $0x470] sm:$0xff]
        %v1813 = vld [vmem:[%s403 + $0x478] sm:$0xff]
        %v1814 = vld [vmem:[%s412] sm:$0x3f]
        %v1816 = vlaneseq
        %v1817 = vshrl.u32 %v1816, 7
        %v1818 = vsub.s32 0, %v1817
        %v1819 = vrot.slane %v1814, %v1818
        %v1820 = vlaneseq
        %v1821 = vshrl.u32 %v1820, 7
        %v1822 = vsub.s32 1, %v1821
        %v1823 = vrot.slane %v1814, %v1822
        %v1824 = vlaneseq
        %v1825 = vshrl.u32 %v1824, 7
        %v1826 = vsub.s32 2, %v1825
        %v1827 = vrot.slane %v1814, %v1826
        %v1828 = vlaneseq
        %v1829 = vshrl.u32 %v1828, 7
        %v1830 = vsub.s32 3, %v1829
        %v1831 = vrot.slane %v1814, %v1830
        %v1832 = vlaneseq
        %v1833 = vshrl.u32 %v1832, 7
        %v1834 = vsub.s32 4, %v1833
        %v1835 = vrot.slane %v1814, %v1834
        %v1836 = vlaneseq
        %v1837 = vshrl.u32 %v1836, 7
        %v1838 = vsub.s32 5, %v1837
        %v1839 = vrot.slane %v1814, %v1838
        %v1847 = vcombine.high %v1669, %v1669
        %v1849 = vunpack.c.l.s4 1983009808
        %v1850 = vunpack.c.0.s8 %v1849
        %v1851 = vlaneseq
        %v1852 = vshrl.u32 %v1851, 7
        %v1853 = vsub.s32 %v1850, %v1852
        %v1854 = vrot.slane %v1669, %v1853
        %v1856 = vunpack.c.l.s4 1983009808
        %v1857 = vunpack.c.0.s8 %v1856
        %v1858 = vlaneseq
        %v1859 = vshrl.u32 %v1858, 7
        %v1860 = vsub.s32 %v1857, %v1859
        %v1861 = vrot.slane %v1847, %v1860
        %v1862 = vcombine.high %v1854, %v1854
        %v2010 = vunpack.c.l.b16 %v1670
        %v2011 = vunpack.c.h.b16 %v1670
        %v2012 = vunpack.c.l.b16 %v1671
        %v2013 = vunpack.c.h.b16 %v1671
        %v2014 = vunpack.c.l.b16 %v1672
        %v2015 = vunpack.c.h.b16 %v1672
        %v2016 = vunpack.c.l.b16 %v1673
        %v2017 = vunpack.c.h.b16 %v1673
        %v2018 = vunpack.c.l.b16 %v1674
        %v2019 = vunpack.c.h.b16 %v1674
        %v2020 = vunpack.c.l.b16 %v1675
        %v2021 = vunpack.c.h.b16 %v1675
        %v2022 = vunpack.c.l.b16 %v1676
        %v2023 = vunpack.c.h.b16 %v1676
        %v2024 = vunpack.c.l.b16 %v1677
        %v2025 = vunpack.c.h.b16 %v1677
        %v2026 = vunpack.c.l.b16 %v1678
        %v2027 = vunpack.c.h.b16 %v1678
        %v2028 = vunpack.c.l.b16 %v1679
        %v2029 = vunpack.c.h.b16 %v1679
        %v2030 = vunpack.c.l.b16 %v1680
        %v2031 = vunpack.c.h.b16 %v1680
        %v2032 = vunpack.c.l.b16 %v1681
        %v2033 = vunpack.c.h.b16 %v1681
        %v2034 = vunpack.c.l.b16 %v1682
        %v2035 = vunpack.c.h.b16 %v1682
        %v2036 = vunpack.c.l.b16 %v1683
        %v2037 = vunpack.c.h.b16 %v1683
        %v2038 = vunpack.c.l.b16 %v1684
        %v2039 = vunpack.c.h.b16 %v1684
        %v2040 = vunpack.c.l.b16 %v1685
        %v2041 = vunpack.c.h.b16 %v1685
        %v2042 = vunpack.c.l.b16 %v1686
        %v2043 = vunpack.c.h.b16 %v1686
        %v2044 = vunpack.c.l.b16 %v1687
        %v2045 = vunpack.c.h.b16 %v1687
        %v2046 = vunpack.c.l.b16 %v1688
        %v2047 = vunpack.c.h.b16 %v1688
        %v2048 = vunpack.c.l.b16 %v1689
        %v2049 = vunpack.c.h.b16 %v1689
        %v2050 = vunpack.c.l.b16 %v1690
        %v2051 = vunpack.c.h.b16 %v1690
        %v2052 = vunpack.c.l.b16 %v1691
        %v2053 = vunpack.c.h.b16 %v1691
        %v2054 = vunpack.c.l.b16 %v1692
        %v2055 = vunpack.c.h.b16 %v1692
        %v2056 = vunpack.c.l.b16 %v1693
        %v2057 = vunpack.c.h.b16 %v1693
        %v2058 = vunpack.c.l.b16 %v1694
        %v2059 = vunpack.c.h.b16 %v1694
        %v2060 = vunpack.c.l.b16 %v1695
        %v2061 = vunpack.c.h.b16 %v1695
        %v2062 = vunpack.c.l.b16 %v1696
        %v2063 = vunpack.c.h.b16 %v1696
        %v2064 = vunpack.c.l.b16 %v1697
        %v2065 = vunpack.c.h.b16 %v1697
        %v2066 = vunpack.c.l.b16 %v1698
        %v2067 = vunpack.c.h.b16 %v1698
        %v2068 = vunpack.c.l.b16 %v1699
        %v2069 = vunpack.c.h.b16 %v1699
        %v2070 = vunpack.c.l.b16 %v1700
        %v2071 = vunpack.c.h.b16 %v1700
        %v2072 = vunpack.c.l.b16 %v1701
        %v2073 = vunpack.c.h.b16 %v1701
        %v2074 = vunpack.c.l.b16 %v1702
        %v2075 = vunpack.c.h.b16 %v1702
        %v2076 = vunpack.c.l.b16 %v1703
        %v2077 = vunpack.c.h.b16 %v1703
        %v2078 = vunpack.c.l.b16 %v1704
        %v2079 = vunpack.c.h.b16 %v1704
        %v2080 = vunpack.c.l.b16 %v1705
        %v2081 = vunpack.c.h.b16 %v1705
        %v2082 = vunpack.c.l.b16 %v1706
        %v2083 = vunpack.c.h.b16 %v1706
        %v2084 = vunpack.c.l.b16 %v1707
        %v2085 = vunpack.c.h.b16 %v1707
        %v2086 = vunpack.c.l.b16 %v1708
        %v2087 = vunpack.c.h.b16 %v1708
        %v2088 = vunpack.c.l.b16 %v1709
        %v2089 = vunpack.c.h.b16 %v1709
        %v2090 = vunpack.c.l.b16 %v1710
        %v2091 = vunpack.c.h.b16 %v1710
        %v2092 = vunpack.c.l.b16 %v1711
        %v2093 = vunpack.c.h.b16 %v1711
        %v2094 = vunpack.c.l.b16 %v1712
        %v2095 = vunpack.c.h.b16 %v1712
        %v2096 = vunpack.c.l.b16 %v1713
        %v2097 = vunpack.c.h.b16 %v1713
        %v2098 = vunpack.c.l.b16 %v1714
        %v2099 = vunpack.c.h.b16 %v1714
        %v2100 = vunpack.c.l.b16 %v1715
        %v2101 = vunpack.c.h.b16 %v1715
        %v2102 = vunpack.c.l.b16 %v1716
        %v2103 = vunpack.c.h.b16 %v1716
        %v2104 = vunpack.c.l.b16 %v1717
        %v2105 = vunpack.c.h.b16 %v1717
        %v2106 = vunpack.c.l.b16 %v1718
        %v2107 = vunpack.c.h.b16 %v1718
        %v2108 = vunpack.c.l.b16 %v1719
        %v2109 = vunpack.c.h.b16 %v1719
        %v2110 = vunpack.c.l.b16 %v1720
        %v2111 = vunpack.c.h.b16 %v1720
        %v2112 = vunpack.c.l.b16 %v1721
        %v2113 = vunpack.c.h.b16 %v1721
        %v2114 = vunpack.c.l.b16 %v1722
        %v2115 = vunpack.c.h.b16 %v1722
        %v2116 = vunpack.c.l.b16 %v1723
        %v2117 = vunpack.c.h.b16 %v1723
        %v2118 = vunpack.c.l.b16 %v1724
        %v2119 = vunpack.c.h.b16 %v1724
        %v2120 = vunpack.c.l.b16 %v1725
        %v2121 = vunpack.c.h.b16 %v1725
        %v2122 = vunpack.c.l.b16 %v1726
        %v2123 = vunpack.c.h.b16 %v1726
        %v2124 = vunpack.c.l.b16 %v1727
        %v2125 = vunpack.c.h.b16 %v1727
        %v2126 = vunpack.c.l.b16 %v1728
        %v2127 = vunpack.c.h.b16 %v1728
        %v2128 = vunpack.c.l.b16 %v1729
        %v2129 = vunpack.c.h.b16 %v1729
        %v2130 = vunpack.c.l.b16 %v1730
        %v2131 = vunpack.c.h.b16 %v1730
        %v2132 = vunpack.c.l.b16 %v1731
        %v2133 = vunpack.c.h.b16 %v1731
        %v2134 = vunpack.c.l.b16 %v1732
        %v2135 = vunpack.c.h.b16 %v1732
        %v2136 = vunpack.c.l.b16 %v1733
        %v2137 = vunpack.c.h.b16 %v1733
        %v2138 = vunpack.c.l.b16 %v1734
        %v2139 = vunpack.c.h.b16 %v1734
        %v2140 = vunpack.c.l.b16 %v1735
        %v2141 = vunpack.c.h.b16 %v1735
        %v2142 = vunpack.c.l.b16 %v1736
        %v2143 = vunpack.c.h.b16 %v1736
        %v2144 = vunpack.c.l.b16 %v1737
        %v2145 = vunpack.c.h.b16 %v1737
        %v2146 = vunpack.c.l.b16 %v1738
        %v2147 = vunpack.c.h.b16 %v1738
        %v2148 = vunpack.c.l.b16 %v1739
        %v2149 = vunpack.c.h.b16 %v1739
        %v2150 = vunpack.c.l.b16 %v1740
        %v2151 = vunpack.c.h.b16 %v1740
        %v2152 = vunpack.c.l.b16 %v1741
        %v2153 = vunpack.c.h.b16 %v1741
        %v2154 = vunpack.c.l.b16 %v1742
        %v2155 = vunpack.c.h.b16 %v1742
        %v2156 = vunpack.c.l.b16 %v1743
        %v2157 = vunpack.c.h.b16 %v1743
        %v2158 = vunpack.c.l.b16 %v1744
        %v2159 = vunpack.c.h.b16 %v1744
        %v2160 = vunpack.c.l.b16 %v1745
        %v2161 = vunpack.c.h.b16 %v1745
        %v2162 = vunpack.c.l.b16 %v1746
        %v2163 = vunpack.c.h.b16 %v1746
        %v2164 = vunpack.c.l.b16 %v1747
        %v2165 = vunpack.c.h.b16 %v1747
        %v2166 = vunpack.c.l.b16 %v1748
        %v2167 = vunpack.c.h.b16 %v1748
        %v2168 = vunpack.c.l.b16 %v1749
        %v2169 = vunpack.c.h.b16 %v1749
        %v2170 = vunpack.c.l.b16 %v1750
        %v2171 = vunpack.c.h.b16 %v1750
        %v2172 = vunpack.c.l.b16 %v1751
        %v2173 = vunpack.c.h.b16 %v1751
        %v2174 = vunpack.c.l.b16 %v1752
        %v2175 = vunpack.c.h.b16 %v1752
        %v2176 = vunpack.c.l.b16 %v1753
        %v2177 = vunpack.c.h.b16 %v1753
        %v2178 = vunpack.c.l.b16 %v1754
        %v2179 = vunpack.c.h.b16 %v1754
        %v2180 = vunpack.c.l.b16 %v1755
        %v2181 = vunpack.c.h.b16 %v1755
        %v2182 = vunpack.c.l.b16 %v1756
        %v2183 = vunpack.c.h.b16 %v1756
        %v2184 = vunpack.c.l.b16 %v1757
        %v2185 = vunpack.c.h.b16 %v1757
        %v2186 = vunpack.c.l.b16 %v1758
        %v2187 = vunpack.c.h.b16 %v1758
        %v2188 = vunpack.c.l.b16 %v1759
        %v2189 = vunpack.c.h.b16 %v1759
        %v2190 = vunpack.c.l.b16 %v1760
        %v2191 = vunpack.c.h.b16 %v1760
        %v2192 = vunpack.c.l.b16 %v1761
        %v2193 = vunpack.c.h.b16 %v1761
        %v2194 = vunpack.c.l.b16 %v1762
        %v2195 = vunpack.c.h.b16 %v1762
        %v2196 = vunpack.c.l.b16 %v1763
        %v2197 = vunpack.c.h.b16 %v1763
        %v2198 = vunpack.c.l.b16 %v1764
        %v2199 = vunpack.c.h.b16 %v1764
        %v2200 = vunpack.c.l.b16 %v1765
        %v2201 = vunpack.c.h.b16 %v1765
        %v2202 = vunpack.c.l.b16 %v1766
        %v2203 = vunpack.c.h.b16 %v1766
        %v2204 = vunpack.c.l.b16 %v1767
        %v2205 = vunpack.c.h.b16 %v1767
        %v2206 = vunpack.c.l.b16 %v1768
        %v2207 = vunpack.c.h.b16 %v1768
        %v2208 = vunpack.c.l.b16 %v1769
        %v2209 = vunpack.c.h.b16 %v1769
        %v2210 = vunpack.c.l.b16 %v1770
        %v2211 = vunpack.c.h.b16 %v1770
        %v2212 = vunpack.c.l.b16 %v1771
        %v2213 = vunpack.c.h.b16 %v1771
        %v2214 = vunpack.c.l.b16 %v1772
        %v2215 = vunpack.c.h.b16 %v1772
        %v2216 = vunpack.c.l.b16 %v1773
        %v2217 = vunpack.c.h.b16 %v1773
        %v2218 = vunpack.c.l.b16 %v1774
        %v2219 = vunpack.c.h.b16 %v1774
        %v2220 = vunpack.c.l.b16 %v1775
        %v2221 = vunpack.c.h.b16 %v1775
        %v2222 = vunpack.c.l.b16 %v1776
        %v2223 = vunpack.c.h.b16 %v1776
        %v2224 = vunpack.c.l.b16 %v1777
        %v2225 = vunpack.c.h.b16 %v1777
        %v2226 = vunpack.c.l.b16 %v1778
        %v2227 = vunpack.c.h.b16 %v1778
        %v2228 = vunpack.c.l.b16 %v1779
        %v2229 = vunpack.c.h.b16 %v1779
        %v2230 = vunpack.c.l.b16 %v1780
        %v2231 = vunpack.c.h.b16 %v1780
        %v2232 = vunpack.c.l.b16 %v1781
        %v2233 = vunpack.c.h.b16 %v1781
        %v2234 = vunpack.c.l.b16 %v1782
        %v2235 = vunpack.c.h.b16 %v1782
        %v2236 = vunpack.c.l.b16 %v1783
        %v2237 = vunpack.c.h.b16 %v1783
        %v2238 = vunpack.c.l.b16 %v1784
        %v2239 = vunpack.c.h.b16 %v1784
        %v2240 = vunpack.c.l.b16 %v1785
        %v2241 = vunpack.c.h.b16 %v1785
        %v2242 = vunpack.c.l.b16 %v1786
        %v2243 = vunpack.c.h.b16 %v1786
        %v2244 = vunpack.c.l.b16 %v1787
        %v2245 = vunpack.c.h.b16 %v1787
        %v2246 = vunpack.c.l.b16 %v1788
        %v2247 = vunpack.c.h.b16 %v1788
        %v2248 = vunpack.c.l.b16 %v1789
        %v2249 = vunpack.c.h.b16 %v1789
        %v2250 = vunpack.c.l.b16 %v1790
        %v2251 = vunpack.c.h.b16 %v1790
        %v2252 = vunpack.c.l.b16 %v1791
        %v2253 = vunpack.c.h.b16 %v1791
        %v2254 = vunpack.c.l.b16 %v1792
        %v2255 = vunpack.c.h.b16 %v1792
        %v2256 = vunpack.c.l.b16 %v1793
        %v2257 = vunpack.c.h.b16 %v1793
        %v2258 = vunpack.c.l.b16 %v1794
        %v2259 = vunpack.c.h.b16 %v1794
        %v2260 = vunpack.c.l.b16 %v1795
        %v2261 = vunpack.c.h.b16 %v1795
        %v2262 = vunpack.c.l.b16 %v1796
        %v2263 = vunpack.c.h.b16 %v1796
        %v2264 = vunpack.c.l.b16 %v1797
        %v2265 = vunpack.c.h.b16 %v1797
        %v2266 = vunpack.c.l.b16 %v1798
        %v2267 = vunpack.c.h.b16 %v1798
        %v2268 = vunpack.c.l.b16 %v1799
        %v2269 = vunpack.c.h.b16 %v1799
        %v2270 = vunpack.c.l.b16 %v1800
        %v2271 = vunpack.c.h.b16 %v1800
        %v2272 = vunpack.c.l.b16 %v1801
        %v2273 = vunpack.c.h.b16 %v1801
        %v2274 = vunpack.c.l.b16 %v1802
        %v2275 = vunpack.c.h.b16 %v1802
        %v2276 = vunpack.c.l.b16 %v1803
        %v2277 = vunpack.c.h.b16 %v1803
        %v2278 = vunpack.c.l.b16 %v1804
        %v2279 = vunpack.c.h.b16 %v1804
        %v2280 = vunpack.c.l.b16 %v1805
        %v2281 = vunpack.c.h.b16 %v1805
        %v2282 = vunpack.c.l.b16 %v1806
        %v2283 = vunpack.c.h.b16 %v1806
        %v2284 = vunpack.c.l.b16 %v1807
        %v2285 = vunpack.c.h.b16 %v1807
        %v2286 = vunpack.c.l.b16 %v1808
        %v2287 = vunpack.c.h.b16 %v1808
        %v2288 = vunpack.c.l.b16 %v1809
        %v2289 = vunpack.c.h.b16 %v1809
        %v2290 = vunpack.c.l.b16 %v1810
        %v2291 = vunpack.c.h.b16 %v1810
        %v2292 = vunpack.c.l.b16 %v1811
        %v2293 = vunpack.c.h.b16 %v1811
        %v2294 = vunpack.c.l.b16 %v1812
        %v2295 = vunpack.c.h.b16 %v1812
        %v2296 = vunpack.c.l.b16 %v1813
        %v2297 = vunpack.c.h.b16 %v1813
        %v2298 = vpack.c.b16 %v2016, %v2010
        %v2299 = vpack.c.b16 %v2017, %v2011
        %v2300 = vpack.c.b16 %v2018, %v2012
        %v2301 = vpack.c.b16 %v2019, %v2013
        %v2302 = vpack.c.b16 %v2020, %v2014
        %v2303 = vpack.c.b16 %v2021, %v2015
        %v2304 = vpack.c.b16 %v2028, %v2022
        %v2305 = vpack.c.b16 %v2029, %v2023
        %v2306 = vpack.c.b16 %v2030, %v2024
        %v2307 = vpack.c.b16 %v2031, %v2025
        %v2308 = vpack.c.b16 %v2032, %v2026
        %v2309 = vpack.c.b16 %v2033, %v2027
        %v2310 = vpack.c.b16 %v2040, %v2034
        %v2311 = vpack.c.b16 %v2041, %v2035
        %v2312 = vpack.c.b16 %v2042, %v2036
        %v2313 = vpack.c.b16 %v2043, %v2037
        %v2314 = vpack.c.b16 %v2044, %v2038
        %v2315 = vpack.c.b16 %v2045, %v2039
        %v2316 = vpack.c.b16 %v2052, %v2046
        %v2317 = vpack.c.b16 %v2053, %v2047
        %v2318 = vpack.c.b16 %v2054, %v2048
        %v2319 = vpack.c.b16 %v2055, %v2049
        %v2320 = vpack.c.b16 %v2056, %v2050
        %v2321 = vpack.c.b16 %v2057, %v2051
        %v2322 = vpack.c.b16 %v2064, %v2058
        %v2323 = vpack.c.b16 %v2065, %v2059
        %v2324 = vpack.c.b16 %v2066, %v2060
        %v2325 = vpack.c.b16 %v2067, %v2061
        %v2326 = vpack.c.b16 %v2068, %v2062
        %v2327 = vpack.c.b16 %v2069, %v2063
        %v2328 = vpack.c.b16 %v2076, %v2070
        %v2329 = vpack.c.b16 %v2077, %v2071
        %v2330 = vpack.c.b16 %v2078, %v2072
        %v2331 = vpack.c.b16 %v2079, %v2073
        %v2332 = vpack.c.b16 %v2080, %v2074
        %v2333 = vpack.c.b16 %v2081, %v2075
        %v2334 = vpack.c.b16 %v2088, %v2082
        %v2335 = vpack.c.b16 %v2089, %v2083
        %v2336 = vpack.c.b16 %v2090, %v2084
        %v2337 = vpack.c.b16 %v2091, %v2085
        %v2338 = vpack.c.b16 %v2092, %v2086
        %v2339 = vpack.c.b16 %v2093, %v2087
        %v2340 = vpack.c.b16 %v2100, %v2094
        %v2341 = vpack.c.b16 %v2101, %v2095
        %v2342 = vpack.c.b16 %v2102, %v2096
        %v2343 = vpack.c.b16 %v2103, %v2097
        %v2344 = vpack.c.b16 %v2104, %v2098
        %v2345 = vpack.c.b16 %v2105, %v2099
        %v2346 = vpack.c.b16 %v2112, %v2106
        %v2347 = vpack.c.b16 %v2113, %v2107
        %v2348 = vpack.c.b16 %v2114, %v2108
        %v2349 = vpack.c.b16 %v2115, %v2109
        %v2350 = vpack.c.b16 %v2116, %v2110
        %v2351 = vpack.c.b16 %v2117, %v2111
        %v2352 = vpack.c.b16 %v2124, %v2118
        %v2353 = vpack.c.b16 %v2125, %v2119
        %v2354 = vpack.c.b16 %v2126, %v2120
        %v2355 = vpack.c.b16 %v2127, %v2121
        %v2356 = vpack.c.b16 %v2128, %v2122
        %v2357 = vpack.c.b16 %v2129, %v2123
        %v2358 = vpack.c.b16 %v2136, %v2130
        %v2359 = vpack.c.b16 %v2137, %v2131
        %v2360 = vpack.c.b16 %v2138, %v2132
        %v2361 = vpack.c.b16 %v2139, %v2133
        %v2362 = vpack.c.b16 %v2140, %v2134
        %v2363 = vpack.c.b16 %v2141, %v2135
        %v2364 = vpack.c.b16 %v2148, %v2142
        %v2365 = vpack.c.b16 %v2149, %v2143
        %v2366 = vpack.c.b16 %v2150, %v2144
        %v2367 = vpack.c.b16 %v2151, %v2145
        %v2368 = vpack.c.b16 %v2152, %v2146
        %v2369 = vpack.c.b16 %v2153, %v2147
        %v2370 = vpack.c.b16 %v2160, %v2154
        %v2371 = vpack.c.b16 %v2161, %v2155
        %v2372 = vpack.c.b16 %v2162, %v2156
        %v2373 = vpack.c.b16 %v2163, %v2157
        %v2374 = vpack.c.b16 %v2164, %v2158
        %v2375 = vpack.c.b16 %v2165, %v2159
        %v2376 = vpack.c.b16 %v2172, %v2166
        %v2377 = vpack.c.b16 %v2173, %v2167
        %v2378 = vpack.c.b16 %v2174, %v2168
        %v2379 = vpack.c.b16 %v2175, %v2169
        %v2380 = vpack.c.b16 %v2176, %v2170
        %v2381 = vpack.c.b16 %v2177, %v2171
        %v2382 = vpack.c.b16 %v2184, %v2178
        %v2383 = vpack.c.b16 %v2185, %v2179
        %v2384 = vpack.c.b16 %v2186, %v2180
        %v2385 = vpack.c.b16 %v2187, %v2181
        %v2386 = vpack.c.b16 %v2188, %v2182
        %v2387 = vpack.c.b16 %v2189, %v2183
        %v2388 = vpack.c.b16 %v2196, %v2190
        %v2389 = vpack.c.b16 %v2197, %v2191
        %v2390 = vpack.c.b16 %v2198, %v2192
        %v2391 = vpack.c.b16 %v2199, %v2193
        %v2392 = vpack.c.b16 %v2200, %v2194
        %v2393 = vpack.c.b16 %v2201, %v2195
        %v2394 = vpack.c.b16 %v2208, %v2202
        %v2395 = vpack.c.b16 %v2209, %v2203
        %v2396 = vpack.c.b16 %v2210, %v2204
        %v2397 = vpack.c.b16 %v2211, %v2205
        %v2398 = vpack.c.b16 %v2212, %v2206
        %v2399 = vpack.c.b16 %v2213, %v2207
        %v2400 = vpack.c.b16 %v2220, %v2214
        %v2401 = vpack.c.b16 %v2221, %v2215
        %v2402 = vpack.c.b16 %v2222, %v2216
        %v2403 = vpack.c.b16 %v2223, %v2217
        %v2404 = vpack.c.b16 %v2224, %v2218
        %v2405 = vpack.c.b16 %v2225, %v2219
        %v2406 = vpack.c.b16 %v2232, %v2226
        %v2407 = vpack.c.b16 %v2233, %v2227
        %v2408 = vpack.c.b16 %v2234, %v2228
        %v2409 = vpack.c.b16 %v2235, %v2229
        %v2410 = vpack.c.b16 %v2236, %v2230
        %v2411 = vpack.c.b16 %v2237, %v2231
        %v2412 = vpack.c.b16 %v2244, %v2238
        %v2413 = vpack.c.b16 %v2245, %v2239
        %v2414 = vpack.c.b16 %v2246, %v2240
        %v2415 = vpack.c.b16 %v2247, %v2241
        %v2416 = vpack.c.b16 %v2248, %v2242
        %v2417 = vpack.c.b16 %v2249, %v2243
        %v2418 = vpack.c.b16 %v2256, %v2250
        %v2419 = vpack.c.b16 %v2257, %v2251
        %v2420 = vpack.c.b16 %v2258, %v2252
        %v2421 = vpack.c.b16 %v2259, %v2253
        %v2422 = vpack.c.b16 %v2260, %v2254
        %v2423 = vpack.c.b16 %v2261, %v2255
        %v2424 = vpack.c.b16 %v2268, %v2262
        %v2425 = vpack.c.b16 %v2269, %v2263
        %v2426 = vpack.c.b16 %v2270, %v2264
        %v2427 = vpack.c.b16 %v2271, %v2265
        %v2428 = vpack.c.b16 %v2272, %v2266
        %v2429 = vpack.c.b16 %v2273, %v2267
        %v2430 = vpack.c.b16 %v2280, %v2274
        %v2431 = vpack.c.b16 %v2281, %v2275
        %v2432 = vpack.c.b16 %v2282, %v2276
        %v2433 = vpack.c.b16 %v2283, %v2277
        %v2434 = vpack.c.b16 %v2284, %v2278
        %v2435 = vpack.c.b16 %v2285, %v2279
        %v2436 = vpack.c.b16 %v2292, %v2286
        %v2437 = vpack.c.b16 %v2293, %v2287
        %v2438 = vpack.c.b16 %v2294, %v2288
        %v2439 = vpack.c.b16 %v2295, %v2289
        %v2440 = vpack.c.b16 %v2296, %v2290
        %v2441 = vpack.c.b16 %v2297, %v2291
        %2586 = vmatprep.subr.bf16.mxu0 %v2299
        %2587 = vmatpush1.bf16.msra.mxu0 %v2298
        %2588 = vmatprep.subr.bf16.mxu0 %v2305
        %2589 = vmatpush1.bf16.msra.mxu0 %v2304
        %2590 = vmatprep.subr.bf16.mxu0 %v2311
        %2591 = vmatpush1.bf16.msra.mxu0 %v2310
        %2592 = vmatprep.subr.bf16.mxu0 %v2317
        %2593 = vmatpush1.bf16.msra.mxu0 %v2316
        %2594 = vmatprep.subr.bf16.mxu0 %v2323
        %2595 = vmatpush1.bf16.msra.mxu0 %v2322
        %2596 = vmatprep.subr.bf16.mxu0 %v2329
        %2597 = vmatpush1.bf16.msra.mxu0 %v2328
        %2598 = vmatprep.subr.bf16.mxu0 %v2335
        %2599 = vmatpush1.bf16.msra.mxu0 %v2334
        %2600 = vmatprep.subr.bf16.mxu0 %v2341
        %2601 = vmatpush1.bf16.msra.mxu0 %v2340
        %2602 = vmatprep.subr.bf16.mxu0 %v2347
        %2603 = vmatpush1.bf16.msra.mxu0 %v2346
        %2604 = vmatprep.subr.bf16.mxu0 %v2353
        %2605 = vmatpush1.bf16.msra.mxu0 %v2352
        %2606 = vmatprep.subr.bf16.mxu0 %v2359
        %2607 = vmatpush1.bf16.msra.mxu0 %v2358
        %2608 = vmatprep.subr.bf16.mxu0 %v2365
        %2609 = vmatpush1.bf16.msra.mxu0 %v2364
        %2610 = vmatprep.subr.bf16.mxu0 %v2371
        %2611 = vmatpush1.bf16.msra.mxu0 %v2370
        %2612 = vmatprep.subr.bf16.mxu0 %v2377
        %2613 = vmatpush1.bf16.msra.mxu0 %v2376
        %2614 = vmatprep.subr.bf16.mxu0 %v2383
        %2615 = vmatpush1.bf16.msra.mxu0 %v2382
        %2616 = vmatprep.subr.bf16.mxu0 %v2389
        %2617 = vmatpush1.bf16.msra.mxu0 %v2388
        %2618 = vmatprep.mubr.bf16.mxu0 %v1862
        %2619 = vmatmul.mubr.bf16.gmra.mrb[0].mxu0 %v1854
        %v2620 = vpop.f32.mrb[0].mxu0
        %v2621 = vadd.f32 %v1819, %v2620
        %v2622 = vpop.f32.mrb[0].mxu0
        %v2623 = vadd.f32 %v1823, %v2622
        %v2624 = vpop.f32.mrb[0].mxu0
        %v2625 = vpop.f32.mrb[0].mxu0
        %2626 = vdwg.mxu0
        %2627 = vmatprep.subr.bf16.mxu0 %v2395
        %2628 = vmatpush1.bf16.msra.mxu0 %v2394
        %2629 = vmatprep.subr.bf16.mxu0 %v2401
        %2630 = vmatpush1.bf16.msra.mxu0 %v2400
        %2631 = vmatprep.subr.bf16.mxu0 %v2407
        %2632 = vmatpush1.bf16.msra.mxu0 %v2406
        %2633 = vmatprep.subr.bf16.mxu0 %v2413
        %2634 = vmatpush1.bf16.msra.mxu0 %v2412
        %2635 = vmatprep.subr.bf16.mxu0 %v2419
        %2636 = vmatpush1.bf16.msra.mxu0 %v2418
        %2637 = vmatprep.subr.bf16.mxu0 %v2425
        %2638 = vmatpush1.bf16.msra.mxu0 %v2424
        %2639 = vmatprep.subr.bf16.mxu0 %v2431
        %2640 = vmatpush1.bf16.msra.mxu0 %v2430
        %2641 = vmatprep.subr.bf16.mxu0 %v2437
        %2642 = vmatpush1.bf16.msra.mxu0 %v2436
        %2643 = vmatprep.subr.bf16.mxu0 0
        %2644 = vmatpush1.bf16.msra.mxu0 0
        %2645 = vmatprep.subr.bf16.mxu0 0
        %2646 = vmatpush1.bf16.msra.mxu0 0
        %2647 = vmatprep.subr.bf16.mxu0 0
        %2648 = vmatpush1.bf16.msra.mxu0 0
        %2649 = vmatprep.subr.bf16.mxu0 0
        %2650 = vmatpush1.bf16.msra.mxu0 0
        %2651 = vmatprep.subr.bf16.mxu0 0
        %2652 = vmatpush1.bf16.msra.mxu0 0
        %2653 = vmatprep.subr.bf16.mxu0 0
        %2654 = vmatpush1.bf16.msra.mxu0 0
        %2655 = vmatprep.subr.bf16.mxu0 0
        %2656 = vmatpush1.bf16.msra.mxu0 0
        %2657 = vmatprep.subr.bf16.mxu0 0
        %2658 = vmatpush1.bf16.msra.mxu0 0
        %2659 = vmatprep.mubr.bf16.mxu0 0
        %2660 = vmatmul.mubr.bf16.gmra.mrb[0].mxu0 %v1861
        %v2661 = vpop.f32.mrb[0].mxu0
        %v2662 = vadd.f32 %v2621, %v2661
        %v2663 = vpop.f32.mrb[0].mxu0
        %v2664 = vadd.f32 %v2623, %v2663
        %v2665 = vpop.f32.mrb[0].mxu0
        %v2666 = vpop.f32.mrb[0].mxu0
        %2667 = vdwg.mxu0
        %2668 = vmatprep.subr.bf16.mxu0 %v2301
        %2669 = vmatpush1.bf16.msra.mxu0 %v2300
        %2670 = vmatprep.subr.bf16.mxu0 %v2307
        %2671 = vmatpush1.bf16.msra.mxu0 %v2306
        %2672 = vmatprep.subr.bf16.mxu0 %v2313
        %2673 = vmatpush1.bf16.msra.mxu0 %v2312
        %2674 = vmatprep.subr.bf16.mxu0 %v2319
        %2675 = vmatpush1.bf16.msra.mxu0 %v2318
        %2676 = vmatprep.subr.bf16.mxu0 %v2325
        %2677 = vmatpush1.bf16.msra.mxu0 %v2324
        %2678 = vmatprep.subr.bf16.mxu0 %v2331
        %2679 = vmatpush1.bf16.msra.mxu0 %v2330
        %2680 = vmatprep.subr.bf16.mxu0 %v2337
        %2681 = vmatpush1.bf16.msra.mxu0 %v2336
        %2682 = vmatprep.subr.bf16.mxu0 %v2343
        %2683 = vmatpush1.bf16.msra.mxu0 %v2342
        %2684 = vmatprep.subr.bf16.mxu0 %v2349
        %2685 = vmatpush1.bf16.msra.mxu0 %v2348
        %2686 = vmatprep.subr.bf16.mxu0 %v2355
        %2687 = vmatpush1.bf16.msra.mxu0 %v2354
        %2688 = vmatprep.subr.bf16.mxu0 %v2361
        %2689 = vmatpush1.bf16.msra.mxu0 %v2360
        %2690 = vmatprep.subr.bf16.mxu0 %v2367
        %2691 = vmatpush1.bf16.msra.mxu0 %v2366
        %2692 = vmatprep.subr.bf16.mxu0 %v2373
        %2693 = vmatpush1.bf16.msra.mxu0 %v2372
        %2694 = vmatprep.subr.bf16.mxu0 %v2379
        %2695 = vmatpush1.bf16.msra.mxu0 %v2378
        %2696 = vmatprep.subr.bf16.mxu0 %v2385
        %2697 = vmatpush1.bf16.msra.mxu0 %v2384
        %2698 = vmatprep.subr.bf16.mxu0 %v2391
        %2699 = vmatpush1.bf16.msra.mxu0 %v2390
        %2700 = vmatprep.mubr.bf16.mxu0 %v1862
        %2701 = vmatmul.mubr.bf16.gmra.mrb[0].mxu0 %v1854
        %v2702 = vpop.f32.mrb[0].mxu0
        %v2703 = vadd.f32 %v1827, %v2702
        %v2704 = vpop.f32.mrb[0].mxu0
        %v2705 = vadd.f32 %v1831, %v2704
        %v2706 = vpop.f32.mrb[0].mxu0
        %v2707 = vpop.f32.mrb[0].mxu0
        %2708 = vdwg.mxu0
        %2709 = vmatprep.subr.bf16.mxu0 %v2397
        %2710 = vmatpush1.bf16.msra.mxu0 %v2396
        %2711 = vmatprep.subr.bf16.mxu0 %v2403
        %2712 = vmatpush1.bf16.msra.mxu0 %v2402
        %2713 = vmatprep.subr.bf16.mxu0 %v2409
        %2714 = vmatpush1.bf16.msra.mxu0 %v2408
        %2715 = vmatprep.subr.bf16.mxu0 %v2415
        %2716 = vmatpush1.bf16.msra.mxu0 %v2414
        %2717 = vmatprep.subr.bf16.mxu0 %v2421
        %2718 = vmatpush1.bf16.msra.mxu0 %v2420
        %2719 = vmatprep.subr.bf16.mxu0 %v2427
        %2720 = vmatpush1.bf16.msra.mxu0 %v2426
        %2721 = vmatprep.subr.bf16.mxu0 %v2433
        %2722 = vmatpush1.bf16.msra.mxu0 %v2432
        %2723 = vmatprep.subr.bf16.mxu0 %v2439
        %2724 = vmatpush1.bf16.msra.mxu0 %v2438
        %2725 = vmatprep.subr.bf16.mxu0 0
        %2726 = vmatpush1.bf16.msra.mxu0 0
        %2727 = vmatprep.subr.bf16.mxu0 0
        %2728 = vmatpush1.bf16.msra.mxu0 0
        %2729 = vmatprep.subr.bf16.mxu0 0
        %2730 = vmatpush1.bf16.msra.mxu0 0
        %2731 = vmatprep.subr.bf16.mxu0 0
        %2732 = vmatpush1.bf16.msra.mxu0 0
        %2733 = vmatprep.subr.bf16.mxu0 0
        %2734 = vmatpush1.bf16.msra.mxu0 0
        %2735 = vmatprep.subr.bf16.mxu0 0
        %2736 = vmatpush1.bf16.msra.mxu0 0
        %2737 = vmatprep.subr.bf16.mxu0 0
        %2738 = vmatpush1.bf16.msra.mxu0 0
        %2739 = vmatprep.subr.bf16.mxu0 0
        %2740 = vmatpush1.bf16.msra.mxu0 0
        %2741 = vmatprep.mubr.bf16.mxu0 0
        %2742 = vmatmul.mubr.bf16.gmra.mrb[0].mxu0 %v1861
        %v2743 = vpop.f32.mrb[0].mxu0
        %v2744 = vadd.f32 %v2703, %v2743
        %v2745 = vpop.f32.mrb[0].mxu0
        %v2746 = vadd.f32 %v2705, %v2745
        %v2747 = vpop.f32.mrb[0].mxu0
        %v2748 = vpop.f32.mrb[0].mxu0
        %2749 = vdwg.mxu0
        %2750 = vmatprep.subr.bf16.mxu0 %v2303
        %2751 = vmatpush1.bf16.msra.mxu0 %v2302
        %2752 = vmatprep.subr.bf16.mxu0 %v2309
        %2753 = vmatpush1.bf16.msra.mxu0 %v2308
        %2754 = vmatprep.subr.bf16.mxu0 %v2315
        %2755 = vmatpush1.bf16.msra.mxu0 %v2314
        %2756 = vmatprep.subr.bf16.mxu0 %v2321
        %2757 = vmatpush1.bf16.msra.mxu0 %v2320
        %2758 = vmatprep.subr.bf16.mxu0 %v2327
        %2759 = vmatpush1.bf16.msra.mxu0 %v2326
        %2760 = vmatprep.subr.bf16.mxu0 %v2333
        %2761 = vmatpush1.bf16.msra.mxu0 %v2332
        %2762 = vmatprep.subr.bf16.mxu0 %v2339
        %2763 = vmatpush1.bf16.msra.mxu0 %v2338
        %2764 = vmatprep.subr.bf16.mxu0 %v2345
        %2765 = vmatpush1.bf16.msra.mxu0 %v2344
        %2766 = vmatprep.subr.bf16.mxu0 %v2351
        %2767 = vmatpush1.bf16.msra.mxu0 %v2350
        %2768 = vmatprep.subr.bf16.mxu0 %v2357
        %2769 = vmatpush1.bf16.msra.mxu0 %v2356
        %2770 = vmatprep.subr.bf16.mxu0 %v2363
        %2771 = vmatpush1.bf16.msra.mxu0 %v2362
        %2772 = vmatprep.subr.bf16.mxu0 %v2369
        %2773 = vmatpush1.bf16.msra.mxu0 %v2368
        %2774 = vmatprep.subr.bf16.mxu0 %v2375
        %2775 = vmatpush1.bf16.msra.mxu0 %v2374
        %2776 = vmatprep.subr.bf16.mxu0 %v2381
        %2777 = vmatpush1.bf16.msra.mxu0 %v2380
        %2778 = vmatprep.subr.bf16.mxu0 %v2387
        %2779 = vmatpush1.bf16.msra.mxu0 %v2386
        %2780 = vmatprep.subr.bf16.mxu0 %v2393
        %2781 = vmatpush1.bf16.msra.mxu0 %v2392
        %2782 = vmatprep.mubr.bf16.mxu0 %v1862
        %2783 = vmatmul.mubr.bf16.gmra.mrb[0].mxu0 %v1854
        %v2784 = vpop.f32.mrb[0].mxu0
        %v2785 = vadd.f32 %v1835, %v2784
        %v2786 = vpop.f32.mrb[0].mxu0
        %v2787 = vadd.f32 %v1839, %v2786
        %v2788 = vpop.f32.mrb[0].mxu0
        %v2789 = vpop.f32.mrb[0].mxu0
        %2790 = vdwg.mxu0
        %2791 = vmatprep.subr.bf16.mxu0 %v2399
        %2792 = vmatpush1.bf16.msra.mxu0 %v2398
        %2793 = vmatprep.subr.bf16.mxu0 %v2405
        %2794 = vmatpush1.bf16.msra.mxu0 %v2404
        %2795 = vmatprep.subr.bf16.mxu0 %v2411
        %2796 = vmatpush1.bf16.msra.mxu0 %v2410
        %2797 = vmatprep.subr.bf16.mxu0 %v2417
        %2798 = vmatpush1.bf16.msra.mxu0 %v2416
        %2799 = vmatprep.subr.bf16.mxu0 %v2423
        %2800 = vmatpush1.bf16.msra.mxu0 %v2422
        %2801 = vmatprep.subr.bf16.mxu0 %v2429
        %2802 = vmatpush1.bf16.msra.mxu0 %v2428
        %2803 = vmatprep.subr.bf16.mxu0 %v2435
        %2804 = vmatpush1.bf16.msra.mxu0 %v2434
        %2805 = vmatprep.subr.bf16.mxu0 %v2441
        %2806 = vmatpush1.bf16.msra.mxu0 %v2440
        %2807 = vmatprep.subr.bf16.mxu0 0
        %2808 = vmatpush1.bf16.msra.mxu0 0
        %2809 = vmatprep.subr.bf16.mxu0 0
        %2810 = vmatpush1.bf16.msra.mxu0 0
        %2811 = vmatprep.subr.bf16.mxu0 0
        %2812 = vmatpush1.bf16.msra.mxu0 0
        %2813 = vmatprep.subr.bf16.mxu0 0
        %2814 = vmatpush1.bf16.msra.mxu0 0
        %2815 = vmatprep.subr.bf16.mxu0 0
        %2816 = vmatpush1.bf16.msra.mxu0 0
        %2817 = vmatprep.subr.bf16.mxu0 0
        %2818 = vmatpush1.bf16.msra.mxu0 0
        %2819 = vmatprep.subr.bf16.mxu0 0
        %2820 = vmatpush1.bf16.msra.mxu0 0
        %2821 = vmatprep.subr.bf16.mxu0 0
        %2822 = vmatpush1.bf16.msra.mxu0 0
        %2823 = vmatprep.mubr.bf16.mxu0 0
        %2824 = vmatmul.mubr.bf16.gmra.mrb[0].mxu0 %v1861
        %v2825 = vpop.f32.mrb[0].mxu0
        %v2826 = vadd.f32 %v2785, %v2825
        %v2827 = vpop.f32.mrb[0].mxu0
        %v2828 = vadd.f32 %v2787, %v2827
        %v2829 = vpop.f32.mrb[0].mxu0
        %v2830 = vpop.f32.mrb[0].mxu0
        %2831 = vdwg.mxu0
        %v2838 = vcombine.low %v2662, %v2664
        %v2839 = vcombine.low %v2744, %v2746
        %v2840 = vcombine.low %v2826, %v2828
        %2844 = vst [vmem:[%s449] sm:$0xff] %v2838
        %2845 = vst [vmem:[%s449 + $0x8] sm:$0xff] %v2839
        %2846 = vst [vmem:[%s449 + $0x10] sm:$0xff] %v2840
        %s2847 = sand.u32 %s217, 1
        %s2848 = scalar_lea.sflag [#allocation5], %s2847
        %s2849 = sand.u32 %s217, 1
        %s2850 = smul.addr %s2849, 24
        %s2851 = scalar_lea.vmem [#allocation15], %s2850
        // Predicated region
        $region85: #{ada_layer_norm_single.1} parent=51 // pred_check
          %p2852 = pneg %p227
        $region86: #{ada_layer_norm_single.1} parent=51 // pred_check_branch
          %2854 = sbr.rel (%p2852) target = $region88
        $region87: #{ada_layer_norm_single.1} parent=51 // pred_region
          %s2855 = smul.u32 6, %s31
          %s2857 = ssub.s32 384, 384
          %2858 = vsyncadd %s2848, %s2857
          %s2859 = smul.addr %s2855, 64
          %s2860 = scalar_lea.hbm %s8, %s2859
          %s2862 = sshll.u32 %s2851, 4
          %s2863 = int_to_ptr.vmem [resolvable:$true] %s2862
          %2865 = dma.vmem_to_hbm [thread:$0]  %s2863, 384, %s2860, %s2848
        $region88: #{ada_layer_norm_single.1} parent=51 // pred_fallthru
          _
        // Predicated region
        $region89: #{ada_layer_norm_single.1} parent=51 // pred_check
          %p2866 = pneg %p248
        $region90: #{ada_layer_norm_single.1} parent=51 // pred_check_branch
          %2868 = sbr.rel (%p2866) target = $region92
        $region91: #{ada_layer_norm_single.1} parent=51 // pred_region
          %s2870 = ssub.s32 192, 192
          %2871 = vsyncadd [#allocation17], %s2870
          %s2873 = sshll.u32 [#allocation16], 4
          %s2874 = int_to_ptr.vmem [resolvable:$true] %s2873
          %2876 = dma.vmem_to_hbm [thread:$0]  %s2874, 192, %s9, [#allocation17]
        $region92: #{ada_layer_norm_single.1} parent=51 // pred_fallthru
          _
        // Predicated region
        $region93: #{ada_layer_norm_single.1} parent=51 // pred_check
          %p2877 = pneg %p248
        $region94: #{ada_layer_norm_single.1} parent=51 // pred_check_branch
          %2879 = sbr.rel (%p2877) target = $region96
        $region95: #{ada_layer_norm_single.1} parent=51 // pred_region
          %2880 = dma.done [#allocation17], 192
        $region96: #{ada_layer_norm_single.1} parent=51 // pred_fallthru
          _
      $region52: #{ada_layer_norm_single.1} parent=5 // pred_fallthru
        _
      %p2881 = scmp.le.s32.totalorder 2, %s26
      // Predicated region
      $region97: #{ada_layer_norm_single.1} parent=5 // pred_check
        %p2882 = pneg %p2881
      $region98: #{ada_layer_norm_single.1} parent=5 // pred_check_branch
        %2884 = sbr.rel (%p2882) target = $region100
      $region99: #{ada_layer_norm_single.1} parent=5 // pred_region
        %s2885 = ssub.s32 %s26, 2
        // Predicated region
        $region101: #{ada_layer_norm_single.1} parent=99 // pred_check
          %p2886 = pneg %p233
        $region102: #{ada_layer_norm_single.1} parent=99 // pred_check_branch
          %2888 = sbr.rel (%p2886) target = $region104
        $region103: #{ada_layer_norm_single.1} parent=99 // pred_region
          %s2889 = sand.u32 %s218, 1
          %s2890 = scalar_lea.sflag [#allocation5], %s2889
          %s2891 = sand.u32 %s218, 1
          %s2892 = smul.addr %s2891, 24
          %s2893 = scalar_lea.vmem [#allocation15], %s2892
          %2894 = dma.done %s2890, 384
        $region104: #{ada_layer_norm_single.1} parent=99 // pred_fallthru
          _
      $region100: #{ada_layer_norm_single.1} parent=5 // pred_fallthru
        _
    $region6: #{ada_layer_norm_single.1} parent=1 // loop_footer
      %s30 = sadd.s32 1, %s26
    $region7: #{ada_layer_norm_single.1} parent=1 // loop_footer_branch
      %25 = sbr.rel target = $region3
    $region8: #{ada_layer_norm_single.1} parent=1 // loop_exit
      _
    %2895 = vsyncpa [#allocation4], 1
    %s2896 = scalar_lea.sflag [#allocation4], 1
    %2897 = vsyncpa %s2896, 1
    %2898 = vsyncpa [#allocation7], 1
    %2899 = vsyncpa [#allocation10], 1
    %2900 = vsyncpa [#allocation13], 1
    %s2901 = scalar_lea.sflag [#allocation13], 1
    %2902 = vsyncpa %s2901, 1
    %2903 = vsyncpa [#allocation5], 1
    %s2904 = scalar_lea.sflag [#allocation5], 1
    %2905 = vsyncpa %s2904, 1
    %2906 = vsyncpa [#allocation17], 1

</llo_original>
